<compile_context>
chip_gen: v7x
topology: tpu7x:2x2x1
jax: 0.10.0
libtpu: 0.0.40
codegen_flags: <defaults>
</compile_context>

<pallas_src>
import math
import functools

import jax
import jax.numpy as jnp
from jax.experimental import pallas as pl
from jax.experimental.pallas import tpu as pltpu

# Layer dims from the module __init__ (PyTorch: 784 -> 512 -> 256 -> 128 -> 62)
DIMS = [784, 512, 256, 128, 62]
N4_PAD = 128   # 62 -> 128: lane-dense final-layer store (sliced back outside)


def _round_up(x, m):
    return ((x + m - 1) // m) * m


def mlp_kernel(x_ref,
               w1_ref, b1_ref,
               w2_ref, b2_ref,
               w3_ref, b3_ref,
               w4_ref, b4_ref,
               o_ref):
    """Fused 4-layer MLP on one batch tile.

    x_ref:  (TB, 784) f32   (raw input rows; cast to bf16 in-kernel)
    wN_ref: bf16, stored [in, out] (transposed vs PyTorch); w4 column-padded.
    bN_ref: (1, out) f32
    o_ref:  (TB, 128) f32   (columns 62..127 are zeros from padded W4/b4)
    """
    x = x_ref[...].astype(jnp.bfloat16)

    h1 = jnp.dot(x, w1_ref[...], preferred_element_type=jnp.float32) + b1_ref[...]
    h1 = jnp.maximum(h1, 0.0).astype(jnp.bfloat16)

    h2 = jnp.dot(h1, w2_ref[...], preferred_element_type=jnp.float32) + b2_ref[...]
    h2 = jnp.maximum(h2, 0.0).astype(jnp.bfloat16)

    h3 = jnp.dot(h2, w3_ref[...], preferred_element_type=jnp.float32) + b3_ref[...]
    h3 = jnp.maximum(h3, 0.0).astype(jnp.bfloat16)

    h4 = jnp.dot(h3, w4_ref[...], preferred_element_type=jnp.float32) + b4_ref[...]
    o_ref[...] = h4.astype(o_ref.dtype)


def pack_params(params):
    """Convert f32 (W[in,out], b[1,out]) params into padded bf16 kernel operands.

    Do this once per weight set so the per-call path only moves bf16 weights.
    """
    (w1, b1), (w2, b2), (w3, b3), (w4, b4) = params

    # fc4: pad output dim 62 -> 128 with zero columns (bias too).
    w4p = jnp.zeros((DIMS[3], N4_PAD), jnp.float32).at[:, :DIMS[4]].set(w4)
    b4p = jnp.zeros((1, N4_PAD), jnp.float32).at[:, :DIMS[4]].set(b4)

    return [
        w1.astype(jnp.bfloat16), b1.astype(jnp.float32),
        w2.astype(jnp.bfloat16), b2.astype(jnp.float32),
        w3.astype(jnp.bfloat16), b3.astype(jnp.float32),
        w4p.astype(jnp.bfloat16), b4p.astype(jnp.float32),
    ]


@functools.partial(jax.jit, static_argnames=("tb",))
def net_forward(x, packed_params, *, tb=512):
    """x: [B, 784] float32.  packed_params: output of pack_params().

    Returns [B, 62] float32.
    """
    B = x.shape[0]

    # bf16 packs 16 rows per sublane-group -> round batch to 16.
    B16 = _round_up(B, 16)
    if B16 <= 256:
        TB = B16                                     # tiny batch: single tile
    else:
        # >= 2 grid steps so v7x's 2nd TensorCore gets work; TB multiple of
        # 128 to fill the MXU M dimension, capped at `tb`.
        TB = min(tb, _round_up((B16 + 1) // 2, 128))
    B_pad = _round_up(B16, TB)

    # Only batch-row zero padding; no dtype/lane padding in the wrapper.
    x_in = x if B_pad == B else jnp.pad(x, ((0, B_pad - B), (0, 0)))

    (w1, b1, w2, b2, w3, b3, w4, b4) = packed_params

    # Weights/biases: full-array blocks with constant index_map -> fetched
    # once, VMEM-resident across batch-grid iterations (~1.3 MB bf16 total).
    def const_spec(shape):
        return pl.BlockSpec(shape, lambda i: (0, 0))

    grid = (B_pad // TB,)

    flops = 2 * B_pad * (DIMS[0] * DIMS[1] + DIMS[1] * DIMS[2]
                         + DIMS[2] * DIMS[3] + DIMS[3] * N4_PAD)
    bytes_accessed = (
        x_in.size * 4                                    # f32 activations in
        + (w1.size + w2.size + w3.size + w4.size) * 2    # bf16 weights
        + (b1.size + b2.size + b3.size + b4.size) * 4    # f32 biases
        + B_pad * N4_PAD * 4                             # f32 output
    )

    out = pl.pallas_call(
        mlp_kernel,
        out_shape=jax.ShapeDtypeStruct((B_pad, N4_PAD), jnp.float32),
        grid=grid,
        in_specs=[
            # x tile: full 784 last dim (== array dim, so legal), pipelined over batch.
            pl.BlockSpec((TB, DIMS[0]), lambda i: (i, 0)),
            const_spec((DIMS[0], DIMS[1])), const_spec((1, DIMS[1])),   # fc1
            const_spec((DIMS[1], DIMS[2])), const_spec((1, DIMS[2])),   # fc2
            const_spec((DIMS[2], DIMS[3])), const_spec((1, DIMS[3])),   # fc3
            const_spec((DIMS[3], N4_PAD)), const_spec((1, N4_PAD)),     # fc4
        ],
        out_specs=pl.BlockSpec((TB, N4_PAD), lambda i: (i, 0)),
        compiler_params=pltpu.CompilerParams(
            dimension_semantics=("parallel",),     # shard batch tiles across TCs
            vmem_limit_bytes=48 * 1024 * 1024,     # v5e default (16 MiB) too low at TB>=512
        ),
        cost_estimate=pl.CostEstimate(
            flops=flops, transcendentals=0, bytes_accessed=bytes_accessed),
    )(x_in, w1, b1, w2, b2, w3, b3, w4, b4)

    # Strip batch padding and the lane padding of the 62-wide final layer.
    return out[:B, :DIMS[4]]


def init_params(key):
    """Deterministic init matching nn.Linear's default U(-1/sqrt(fan_in), +).

    Weights stored transposed vs PyTorch, i.e. [in_features, out_features],
    so each layer is y = x @ W + b (same math as torch's x @ W.T + b).
    """
    params = []
    for i in range(len(DIMS) - 1):
        fan_in, fan_out = DIMS[i], DIMS[i + 1]
        key, kw, kb = jax.random.split(key, 3)
        bound = 1.0 / math.sqrt(fan_in)
        w = jax.random.uniform(kw, (fan_in, fan_out), jnp.float32, -bound, bound)
        b = jax.random.uniform(kb, (1, fan_out), jnp.float32, -bound, bound)
        params.append((w, b))
    return params


def reference_forward(x, params):
    h = x
    for i, (w, b) in enumerate(params):
        h = h @ w + b
        if i < len(params) - 1:
            h = jnp.maximum(h, 0.0)
    return h


if __name__ == "__main__":
    key = jax.random.PRNGKey(0)
    key, kx = jax.random.split(key)

    B = 20  # exercises batch padding (20 -> 32 rows) and the slice-back path
    x = jax.random.normal(kx, (B, DIMS[0]), jnp.float32)
    params = init_params(key)
    packed = pack_params(params)

    out = jax.block_until_ready(net_forward(x, packed))

    ref = reference_forward(x, params)  # f32 reference
    assert out.shape == (B, DIMS[-1]), out.shape
    # bf16 weights/activations with f32 accumulation -> loosened tolerance.
    assert jnp.allclose(out, ref, atol=5e-2, rtol=5e-2), "mismatch vs reference"

    print("KERNEL_OK")
</pallas_src>

<mosaic_0001>
module attributes {stable_mosaic.version = 11 : i64} {
  func.func @mlp_kernel(%arg0: i32, %arg1: memref<32x784xf32, #tpu.memory_space<vmem>>, %arg2: memref<784x512xbf16, #tpu.memory_space<vmem>>, %arg3: memref<1x512xf32, #tpu.memory_space<vmem>>, %arg4: memref<512x256xbf16, #tpu.memory_space<vmem>>, %arg5: memref<1x256xf32, #tpu.memory_space<vmem>>, %arg6: memref<256x128xbf16, #tpu.memory_space<vmem>>, %arg7: memref<1x128xf32, #tpu.memory_space<vmem>>, %arg8: memref<128x128xbf16, #tpu.memory_space<vmem>>, %arg9: memref<1x128xf32, #tpu.memory_space<vmem>>, %arg10: memref<32x128xf32, #tpu.memory_space<vmem>>) attributes {dimension_semantics = [#tpu.dimension_semantics<parallel>], iteration_bounds = array<i64: 1>, scalar_prefetch = 0 : i64, scratch_operands = 0 : i64, tpu.core_type = #tpu.core_type<tc>, window_params = [{transform_indices = @transform_0, window_bounds = array<i64: 32, 784>}, {pipeline_mode = #tpu.pipeline_mode<synchronous>, transform_indices = @transform_1, window_bounds = array<i64: 784, 512>}, {pipeline_mode = #tpu.pipeline_mode<synchronous>, transform_indices = @transform_2, window_bounds = array<i64: 1, 512>}, {pipeline_mode = #tpu.pipeline_mode<synchronous>, transform_indices = @transform_3, window_bounds = array<i64: 512, 256>}, {pipeline_mode = #tpu.pipeline_mode<synchronous>, transform_indices = @transform_4, window_bounds = array<i64: 1, 256>}, {pipeline_mode = #tpu.pipeline_mode<synchronous>, transform_indices = @transform_5, window_bounds = array<i64: 256, 128>}, {pipeline_mode = #tpu.pipeline_mode<synchronous>, transform_indices = @transform_6, window_bounds = array<i64: 1, 128>}, {pipeline_mode = #tpu.pipeline_mode<synchronous>, transform_indices = @transform_7, window_bounds = array<i64: 128, 128>}, {pipeline_mode = #tpu.pipeline_mode<synchronous>, transform_indices = @transform_8, window_bounds = array<i64: 1, 128>}, {transform_indices = @transform_9, window_bounds = array<i64: 32, 128>}]} {
    %c0 = arith.constant 0 : index
    %c0_0 = arith.constant 0 : index
    %0 = vector.load %arg1[%c0, %c0_0] : memref<32x784xf32, #tpu.memory_space<vmem>>, vector<32x784xf32>
    %1 = arith.truncf %0 : vector<32x784xf32> to vector<32x784xbf16>
    %c0_1 = arith.constant 0 : index
    %c0_2 = arith.constant 0 : index
    %2 = vector.load %arg2[%c0_1, %c0_2] : memref<784x512xbf16, #tpu.memory_space<vmem>>, vector<784x512xbf16>
    %cst = arith.constant dense<0.000000e+00> : vector<32x512xf32>
    %3 = tpu.matmul %1, %2, %cst {dimension_numbers = #tpu.dot_dimension_numbers<[1], [0], [0], [1], [0, 0, 1, 1], [], []>} : vector<32x784xbf16>, vector<784x512xbf16>, vector<32x512xf32> -> vector<32x512xf32>
    %c0_3 = arith.constant 0 : index
    %c0_4 = arith.constant 0 : index
    %4 = vector.load %arg3[%c0_3, %c0_4] : memref<1x512xf32, #tpu.memory_space<vmem>>, vector<1x512xf32>
    %5 = vector.broadcast %4 : vector<1x512xf32> to vector<32x512xf32>
    %6 = arith.addf %3, %5 : vector<32x512xf32>
    %cst_5 = arith.constant 0.000000e+00 : f32
    %7 = vector.broadcast %cst_5 : f32 to vector<32x512xf32>
    %8 = arith.maximumf %6, %7 : vector<32x512xf32>
    %9 = arith.truncf %8 : vector<32x512xf32> to vector<32x512xbf16>
    %c0_6 = arith.constant 0 : index
    %c0_7 = arith.constant 0 : index
    %10 = vector.load %arg4[%c0_6, %c0_7] : memref<512x256xbf16, #tpu.memory_space<vmem>>, vector<512x256xbf16>
    %cst_8 = arith.constant dense<0.000000e+00> : vector<32x256xf32>
    %11 = tpu.matmul %9, %10, %cst_8 {dimension_numbers = #tpu.dot_dimension_numbers<[1], [0], [0], [1], [0, 0, 1, 1], [], []>} : vector<32x512xbf16>, vector<512x256xbf16>, vector<32x256xf32> -> vector<32x256xf32>
    %c0_9 = arith.constant 0 : index
    %c0_10 = arith.constant 0 : index
    %12 = vector.load %arg5[%c0_9, %c0_10] : memref<1x256xf32, #tpu.memory_space<vmem>>, vector<1x256xf32>
    %13 = vector.broadcast %12 : vector<1x256xf32> to vector<32x256xf32>
    %14 = arith.addf %11, %13 : vector<32x256xf32>
    %cst_11 = arith.constant 0.000000e+00 : f32
    %15 = vector.broadcast %cst_11 : f32 to vector<32x256xf32>
    %16 = arith.maximumf %14, %15 : vector<32x256xf32>
    %17 = arith.truncf %16 : vector<32x256xf32> to vector<32x256xbf16>
    %c0_12 = arith.constant 0 : index
    %c0_13 = arith.constant 0 : index
    %18 = vector.load %arg6[%c0_12, %c0_13] : memref<256x128xbf16, #tpu.memory_space<vmem>>, vector<256x128xbf16>
    %cst_14 = arith.constant dense<0.000000e+00> : vector<32x128xf32>
    %19 = tpu.matmul %17, %18, %cst_14 {dimension_numbers = #tpu.dot_dimension_numbers<[1], [0], [0], [1], [0, 0, 1, 1], [], []>} : vector<32x256xbf16>, vector<256x128xbf16>, vector<32x128xf32> -> vector<32x128xf32>
    %c0_15 = arith.constant 0 : index
    %c0_16 = arith.constant 0 : index
    %20 = vector.load %arg7[%c0_15, %c0_16] : memref<1x128xf32, #tpu.memory_space<vmem>>, vector<1x128xf32>
    %21 = vector.broadcast %20 : vector<1x128xf32> to vector<32x128xf32>
    %22 = arith.addf %19, %21 : vector<32x128xf32>
    %cst_17 = arith.constant 0.000000e+00 : f32
    %23 = vector.broadcast %cst_17 : f32 to vector<32x128xf32>
    %24 = arith.maximumf %22, %23 : vector<32x128xf32>
    %25 = arith.truncf %24 : vector<32x128xf32> to vector<32x128xbf16>
    %c0_18 = arith.constant 0 : index
    %c0_19 = arith.constant 0 : index
    %26 = vector.load %arg8[%c0_18, %c0_19] : memref<128x128xbf16, #tpu.memory_space<vmem>>, vector<128x128xbf16>
    %cst_20 = arith.constant dense<0.000000e+00> : vector<32x128xf32>
    %27 = tpu.matmul %25, %26, %cst_20 {dimension_numbers = #tpu.dot_dimension_numbers<[1], [0], [0], [1], [0, 0, 1, 1], [], []>} : vector<32x128xbf16>, vector<128x128xbf16>, vector<32x128xf32> -> vector<32x128xf32>
    %c0_21 = arith.constant 0 : index
    %c0_22 = arith.constant 0 : index
    %28 = vector.load %arg9[%c0_21, %c0_22] : memref<1x128xf32, #tpu.memory_space<vmem>>, vector<1x128xf32>
    %29 = vector.broadcast %28 : vector<1x128xf32> to vector<32x128xf32>
    %30 = arith.addf %27, %29 : vector<32x128xf32>
    %c0_23 = arith.constant 0 : index
    %c0_24 = arith.constant 0 : index
    %31 = vector.load %arg10[%c0_23, %c0_24] : memref<32x128xf32, #tpu.memory_space<vmem>>, vector<32x128xf32>
    tpu.vector_store %arg10[%c0_23, %c0_24], %30 {strides = array<i32>} : memref<32x128xf32, #tpu.memory_space<vmem>>, vector<32x128xf32>,
    return
  }
  func.func @transform_0(%arg0: i32) -> (i32, i32) {
    %c0_i32 = arith.constant 0 : i32
    %c0_i32_0 = arith.constant 0 : i32
    return %arg0, %c0_i32 : i32, i32
  }
  func.func @transform_1(%arg0: i32) -> (i32, i32) {
    %c0_i32 = arith.constant 0 : i32
    %c0_i32_0 = arith.constant 0 : i32
    %c0_i32_1 = arith.constant 0 : i32
    return %c0_i32, %c0_i32_0 : i32, i32
  }
  func.func @transform_2(%arg0: i32) -> (i32, i32) {
    %c0_i32 = arith.constant 0 : i32
    %c0_i32_0 = arith.constant 0 : i32
    %c0_i32_1 = arith.constant 0 : i32
    return %c0_i32, %c0_i32_0 : i32, i32
  }
  func.func @transform_3(%arg0: i32) -> (i32, i32) {
    %c0_i32 = arith.constant 0 : i32
    %c0_i32_0 = arith.constant 0 : i32
    %c0_i32_1 = arith.constant 0 : i32
    return %c0_i32, %c0_i32_0 : i32, i32
  }
  func.func @transform_4(%arg0: i32) -> (i32, i32) {
    %c0_i32 = arith.constant 0 : i32
    %c0_i32_0 = arith.constant 0 : i32
    %c0_i32_1 = arith.constant 0 : i32
    return %c0_i32, %c0_i32_0 : i32, i32
  }
  func.func @transform_5(%arg0: i32) -> (i32, i32) {
    %c0_i32 = arith.constant 0 : i32
    %c0_i32_0 = arith.constant 0 : i32
    %c0_i32_1 = arith.constant 0 : i32
    return %c0_i32, %c0_i32_0 : i32, i32
  }
  func.func @transform_6(%arg0: i32) -> (i32, i32) {
    %c0_i32 = arith.constant 0 : i32
    %c0_i32_0 = arith.constant 0 : i32
    %c0_i32_1 = arith.constant 0 : i32
    return %c0_i32, %c0_i32_0 : i32, i32
  }
  func.func @transform_7(%arg0: i32) -> (i32, i32) {
    %c0_i32 = arith.constant 0 : i32
    %c0_i32_0 = arith.constant 0 : i32
    %c0_i32_1 = arith.constant 0 : i32
    return %c0_i32, %c0_i32_0 : i32, i32
  }
  func.func @transform_8(%arg0: i32) -> (i32, i32) {
    %c0_i32 = arith.constant 0 : i32
    %c0_i32_0 = arith.constant 0 : i32
    %c0_i32_1 = arith.constant 0 : i32
    return %c0_i32, %c0_i32_0 : i32, i32
  }
  func.func @transform_9(%arg0: i32) -> (i32, i32) {
    %c0_i32 = arith.constant 0 : i32
    %c0_i32_0 = arith.constant 0 : i32
    return %arg0, %c0_i32 : i32, i32
  }
}

</mosaic_0001>

<llo_original>
// kernel: net_forward.1
$region0: #{net_forward.1}
  #allocation0 [shape = 'u32[]', space=smem, size = 0x4, offset = 0x4, fixed_abs, tag = 'smem constant byte address 0x4 - core index']
  #allocation1 [shape = 'u32[144,128]{1,0:T(1,128)}', space=vmem, size = 0x12000, scoped, tag = 'internal scratch']
  %s0 = inlined_call_operand.vmem [shape: f32[32,784], index: 0, kind: input, shape index: {}]
  %s1 = inlined_call_operand.hbm [shape: bf16[784,512], index: 1, kind: input, shape index: {}]
  %s2 = inlined_call_operand.vmem [shape: f32[1,512], index: 2, kind: input, shape index: {}]
  %s3 = inlined_call_operand.hbm [shape: bf16[512,256], index: 3, kind: input, shape index: {}]
  %s4 = inlined_call_operand.vmem [shape: f32[1,256], index: 4, kind: input, shape index: {}]
  %s5 = inlined_call_operand.vmem [shape: bf16[256,128], index: 5, kind: input, shape index: {}]
  %s6 = inlined_call_operand.vmem [shape: f32[1,128], index: 6, kind: input, shape index: {}]
  %s7 = inlined_call_operand.vmem [shape: bf16[128,128], index: 7, kind: input, shape index: {}]
  %s8 = inlined_call_operand.vmem [shape: f32[1,128], index: 8, kind: input, shape index: {}]
  %s9 = inlined_call_operand.vmem [shape: f32[32,128], index: 9, kind: output, shape index: {}]
  %s10 = sld [smem:[#allocation0]]
  $region54: #{net_forward.1} parent=0
    _
  %s12 = ssub.s32 1, %s10
  %s13 = scalar_select 0, %s12, %s10
  $region1: #{net_forward.1} parent=0
    #allocation2 [shape = 'u8[802816]{0}', space=vmem, size = 0xc4000, scoped, tag = 'input window, operand 1, single buffered']
    #allocation3 [shape = 's32[1]{0}', space=sflag, size = 0x4, scoped, tag = 'scoped memory for net_forward.1']
    #allocation4 [shape = 'u8[262144]{0}', space=vmem, size = 0x40000, scoped, tag = 'input window, operand 3, single buffered']
    #allocation5 [shape = 's32[1]{0}', space=sflag, size = 0x4, scoped, tag = 'scoped memory for net_forward.1']
    %14 = vsyncpa [#allocation3], 0
    %15 = vsyncpa [#allocation5], 0
    // Predicated region
    $region2: #{net_forward.1} parent=1 // pred_check
      _
    $region3: #{net_forward.1} parent=1 // pred_check_branch
      %17 = sbr.rel (0) target = $region5
    $region4: #{net_forward.1} parent=1 // pred_region
      _
    $region5: #{net_forward.1} parent=1 // pred_fallthru
      _
    // Predicated region
    $region6: #{net_forward.1} parent=1 // pred_check
      _
    $region7: #{net_forward.1} parent=1 // pred_check_branch
      %19 = sbr.rel (0) target = $region9
    $region8: #{net_forward.1} parent=1 // pred_region
      %s21 = ssub.s32 25088, 25088
      %22 = vsyncadd [#allocation3], %s21
      %s23 = sshll.u32 [#allocation2], 4
      %s24 = int_to_ptr.vmem [resolvable:$true] %s23
      %29 = dma.hbm_to_vmem [thread:$0]  %s1, 25088, %s24, [#allocation3], 256, 256, 16
    $region9: #{net_forward.1} parent=1 // pred_fallthru
      _
    // Predicated region
    $region10: #{net_forward.1} parent=1 // pred_check
      _
    $region11: #{net_forward.1} parent=1 // pred_check_branch
      %31 = sbr.rel (0) target = $region13
    $region12: #{net_forward.1} parent=1 // pred_region
      _
    $region13: #{net_forward.1} parent=1 // pred_fallthru
      _
    // Predicated region
    $region14: #{net_forward.1} parent=1 // pred_check
      _
    $region15: #{net_forward.1} parent=1 // pred_check_branch
      %33 = sbr.rel (0) target = $region17
    $region16: #{net_forward.1} parent=1 // pred_region
      %s35 = ssub.s32 8192, 8192
      %36 = vsyncadd [#allocation5], %s35
      %s37 = sshll.u32 [#allocation4], 4
      %s38 = int_to_ptr.vmem [resolvable:$true] %s37
      %43 = dma.hbm_to_vmem [thread:$0]  %s3, 8192, %s38, [#allocation5], 128, 128, 8
    $region17: #{net_forward.1} parent=1 // pred_fallthru
      _
    // Predicated region
    $region18: #{net_forward.1} parent=1 // pred_check
      _
    $region19: #{net_forward.1} parent=1 // pred_check_branch
      %45 = sbr.rel (0) target = $region21
    $region20: #{net_forward.1} parent=1 // pred_region
      _
    $region21: #{net_forward.1} parent=1 // pred_fallthru
      _
    // Predicated region
    $region22: #{net_forward.1} parent=1 // pred_check
      _
    $region23: #{net_forward.1} parent=1 // pred_check_branch
      %47 = sbr.rel (0) target = $region25
    $region24: #{net_forward.1} parent=1 // pred_region
      _
    $region25: #{net_forward.1} parent=1 // pred_fallthru
      _
    // Predicated region
    $region26: #{net_forward.1} parent=1 // pred_check
      _
    $region27: #{net_forward.1} parent=1 // pred_check_branch
      %49 = sbr.rel (0) target = $region29
    $region28: #{net_forward.1} parent=1 // pred_region
      _
    $region29: #{net_forward.1} parent=1 // pred_fallthru
      _
    // Predicated region
    $region30: #{net_forward.1} parent=1 // pred_check
      _
    $region31: #{net_forward.1} parent=1 // pred_check_branch
      %51 = sbr.rel (0) target = $region33
    $region32: #{net_forward.1} parent=1 // pred_region
      _
    $region33: #{net_forward.1} parent=1 // pred_fallthru
      _
    // Predicated region
    $region34: #{net_forward.1} parent=1 // pred_check
      _
    $region35: #{net_forward.1} parent=1 // pred_check_branch
      %53 = sbr.rel (0) target = $region37
    $region36: #{net_forward.1} parent=1 // pred_region
      _
    $region37: #{net_forward.1} parent=1 // pred_fallthru
      _
    // Predicated region
    $region38: #{net_forward.1} parent=1 // pred_check
      _
    $region39: #{net_forward.1} parent=1 // pred_check_branch
      %55 = sbr.rel (0) target = $region41
    $region40: #{net_forward.1} parent=1 // pred_region
      %56 = dma.done [#allocation3], 25088
    $region41: #{net_forward.1} parent=1 // pred_fallthru
      _
    // Predicated region
    $region42: #{net_forward.1} parent=1 // pred_check
      _
    $region43: #{net_forward.1} parent=1 // pred_check_branch
      %58 = sbr.rel (0) target = $region45
    $region44: #{net_forward.1} parent=1 // pred_region
      %59 = dma.done [#allocation5], 8192
    $region45: #{net_forward.1} parent=1 // pred_fallthru
      _
    %v61 = vld [vmem:[%s0] sm:$0xff]
    %v62 = vld [vmem:[%s0 + $0x8] sm:$0xff]
    %v63 = vld [vmem:[%s0 + $0x10] sm:$0xff]
    %v64 = vld [vmem:[%s0 + $0x18] sm:$0xff]
    %v65 = vld [vmem:[%s0 + $0x20] sm:$0xff]
    %v66 = vld [vmem:[%s0 + $0x28] sm:$0xff]
    %v67 = vld [vmem:[%s0 + $0x30] sm:$0xff]
    %v68 = vld [vmem:[%s0 + $0x38] sm:$0xff]
    %v69 = vld [vmem:[%s0 + $0x40] sm:$0xff]
    %v70 = vld [vmem:[%s0 + $0x48] sm:$0xff]
    %v71 = vld [vmem:[%s0 + $0x50] sm:$0xff]
    %v72 = vld [vmem:[%s0 + $0x58] sm:$0xff]
    %v73 = vld [vmem:[%s0 + $0x60] sm:$0xff]
    %v74 = vld [vmem:[%s0 + $0x68] sm:$0xff]
    %v75 = vld [vmem:[%s0 + $0x70] sm:$0xff]
    %v76 = vld [vmem:[%s0 + $0x78] sm:$0xff]
    %v77 = vld [vmem:[%s0 + $0x80] sm:$0xff]
    %v78 = vld [vmem:[%s0 + $0x88] sm:$0xff]
    %v79 = vld [vmem:[%s0 + $0x90] sm:$0xff]
    %v80 = vld [vmem:[%s0 + $0x98] sm:$0xff]
    %v81 = vld [vmem:[%s0 + $0xa0] sm:$0xff]
    %v82 = vld [vmem:[%s0 + $0xa8] sm:$0xff]
    %v83 = vld [vmem:[%s0 + $0xb0] sm:$0xff]
    %v84 = vld [vmem:[%s0 + $0xb8] sm:$0xff]
    %v85 = vld [vmem:[%s0 + $0xc0] sm:$0xff]
    %v86 = vld [vmem:[%s0 + $0xc8] sm:$0xff]
    %v87 = vld [vmem:[%s0 + $0xd0] sm:$0xff]
    %v88 = vld [vmem:[%s0 + $0xd8] sm:$0xff]
    %v89 = vpack.c.bf16 %v68, %v61
    %v90 = vpack.c.bf16 %v69, %v62
    %v91 = vpack.c.bf16 %v70, %v63
    %v92 = vpack.c.bf16 %v71, %v64
    %v93 = vpack.c.bf16 %v72, %v65
    %v94 = vpack.c.bf16 %v73, %v66
    %v95 = vpack.c.bf16 %v74, %v67
    %v96 = vpack.c.bf16 %v82, %v75
    %v97 = vpack.c.bf16 %v83, %v76
    %v98 = vpack.c.bf16 %v84, %v77
    %v99 = vpack.c.bf16 %v85, %v78
    %v100 = vpack.c.bf16 %v86, %v79
    %v101 = vpack.c.bf16 %v87, %v80
    %v102 = vpack.c.bf16 %v88, %v81
    %v103 = vld [vmem:[#allocation2] sm:$0xff]
    %v104 = vld [vmem:[#allocation2 + $0x8] sm:$0xff]
    %v105 = vld [vmem:[#allocation2 + $0x10] sm:$0xff]
    %v106 = vld [vmem:[#allocation2 + $0x18] sm:$0xff]
    %v107 = vld [vmem:[#allocation2 + $0x20] sm:$0xff]
    %v108 = vld [vmem:[#allocation2 + $0x28] sm:$0xff]
    %v109 = vld [vmem:[#allocation2 + $0x30] sm:$0xff]
    %v110 = vld [vmem:[#allocation2 + $0x38] sm:$0xff]
    %v111 = vld [vmem:[#allocation2 + $0x40] sm:$0xff]
    %v112 = vld [vmem:[#allocation2 + $0x48] sm:$0xff]
    %v113 = vld [vmem:[#allocation2 + $0x50] sm:$0xff]
    %v114 = vld [vmem:[#allocation2 + $0x58] sm:$0xff]
    %v115 = vld [vmem:[#allocation2 + $0x60] sm:$0xff]
    %v116 = vld [vmem:[#allocation2 + $0x68] sm:$0xff]
    %v117 = vld [vmem:[#allocation2 + $0x70] sm:$0xff]
    %v118 = vld [vmem:[#allocation2 + $0x78] sm:$0xff]
    %v119 = vld [vmem:[#allocation2 + $0x80] sm:$0xff]
    %v120 = vld [vmem:[#allocation2 + $0x88] sm:$0xff]
    %v121 = vld [vmem:[#allocation2 + $0x90] sm:$0xff]
    %v122 = vld [vmem:[#allocation2 + $0x98] sm:$0xff]
    %v123 = vld [vmem:[#allocation2 + $0xa0] sm:$0xff]
    %v124 = vld [vmem:[#allocation2 + $0xa8] sm:$0xff]
    %v125 = vld [vmem:[#allocation2 + $0xb0] sm:$0xff]
    %v126 = vld [vmem:[#allocation2 + $0xb8] sm:$0xff]
    %v127 = vld [vmem:[#allocation2 + $0xc0] sm:$0xff]
    %v128 = vld [vmem:[#allocation2 + $0xc8] sm:$0xff]
    %v129 = vld [vmem:[#allocation2 + $0xd0] sm:$0xff]
    %v130 = vld [vmem:[#allocation2 + $0xd8] sm:$0xff]
    %v131 = vld [vmem:[#allocation2 + $0xe0] sm:$0xff]
    %v132 = vld [vmem:[#allocation2 + $0xe8] sm:$0xff]
    %v133 = vld [vmem:[#allocation2 + $0xf0] sm:$0xff]
    %v134 = vld [vmem:[#allocation2 + $0xf8] sm:$0xff]
    %v135 = vld [vmem:[#allocation2 + $0x100] sm:$0xff]
    %v136 = vld [vmem:[#allocation2 + $0x108] sm:$0xff]
    %v137 = vld [vmem:[#allocation2 + $0x110] sm:$0xff]
    %v138 = vld [vmem:[#allocation2 + $0x118] sm:$0xff]
    %v139 = vld [vmem:[#allocation2 + $0x120] sm:$0xff]
    %v140 = vld [vmem:[#allocation2 + $0x128] sm:$0xff]
    %v141 = vld [vmem:[#allocation2 + $0x130] sm:$0xff]
    %v142 = vld [vmem:[#allocation2 + $0x138] sm:$0xff]
    %v143 = vld [vmem:[#allocation2 + $0x140] sm:$0xff]
    %v144 = vld [vmem:[#allocation2 + $0x148] sm:$0xff]
    %v145 = vld [vmem:[#allocation2 + $0x150] sm:$0xff]
    %v146 = vld [vmem:[#allocation2 + $0x158] sm:$0xff]
    %v147 = vld [vmem:[#allocation2 + $0x160] sm:$0xff]
    %v148 = vld [vmem:[#allocation2 + $0x168] sm:$0xff]
    %v149 = vld [vmem:[#allocation2 + $0x170] sm:$0xff]
    %v150 = vld [vmem:[#allocation2 + $0x178] sm:$0xff]
    %v151 = vld [vmem:[#allocation2 + $0x180] sm:$0xff]
    %v152 = vld [vmem:[#allocation2 + $0x188] sm:$0xff]
    %v153 = vld [vmem:[#allocation2 + $0x190] sm:$0xff]
    %v154 = vld [vmem:[#allocation2 + $0x198] sm:$0xff]
    %v155 = vld [vmem:[#allocation2 + $0x1a0] sm:$0xff]
    %v156 = vld [vmem:[#allocation2 + $0x1a8] sm:$0xff]
    %v157 = vld [vmem:[#allocation2 + $0x1b0] sm:$0xff]
    %v158 = vld [vmem:[#allocation2 + $0x1b8] sm:$0xff]
    %v159 = vld [vmem:[#allocation2 + $0x1c0] sm:$0xff]
    %v160 = vld [vmem:[#allocation2 + $0x1c8] sm:$0xff]
    %v161 = vld [vmem:[#allocation2 + $0x1d0] sm:$0xff]
    %v162 = vld [vmem:[#allocation2 + $0x1d8] sm:$0xff]
    %v163 = vld [vmem:[#allocation2 + $0x1e0] sm:$0xff]
    %v164 = vld [vmem:[#allocation2 + $0x1e8] sm:$0xff]
    %v165 = vld [vmem:[#allocation2 + $0x1f0] sm:$0xff]
    %v166 = vld [vmem:[#allocation2 + $0x1f8] sm:$0xff]
    %v167 = vld [vmem:[#allocation2 + $0x200] sm:$0xff]
    %v168 = vld [vmem:[#allocation2 + $0x208] sm:$0xff]
    %v169 = vld [vmem:[#allocation2 + $0x210] sm:$0xff]
    %v170 = vld [vmem:[#allocation2 + $0x218] sm:$0xff]
    %v171 = vld [vmem:[#allocation2 + $0x220] sm:$0xff]
    %v172 = vld [vmem:[#allocation2 + $0x228] sm:$0xff]
    %v173 = vld [vmem:[#allocation2 + $0x230] sm:$0xff]
    %v174 = vld [vmem:[#allocation2 + $0x238] sm:$0xff]
    %v175 = vld [vmem:[#allocation2 + $0x240] sm:$0xff]
    %v176 = vld [vmem:[#allocation2 + $0x248] sm:$0xff]
    %v177 = vld [vmem:[#allocation2 + $0x250] sm:$0xff]
    %v178 = vld [vmem:[#allocation2 + $0x258] sm:$0xff]
    %v179 = vld [vmem:[#allocation2 + $0x260] sm:$0xff]
    %v180 = vld [vmem:[#allocation2 + $0x268] sm:$0xff]
    %v181 = vld [vmem:[#allocation2 + $0x270] sm:$0xff]
    %v182 = vld [vmem:[#allocation2 + $0x278] sm:$0xff]
    %v183 = vld [vmem:[#allocation2 + $0x280] sm:$0xff]
    %v184 = vld [vmem:[#allocation2 + $0x288] sm:$0xff]
    %v185 = vld [vmem:[#allocation2 + $0x290] sm:$0xff]
    %v186 = vld [vmem:[#allocation2 + $0x298] sm:$0xff]
    %v187 = vld [vmem:[#allocation2 + $0x2a0] sm:$0xff]
    %v188 = vld [vmem:[#allocation2 + $0x2a8] sm:$0xff]
    %v189 = vld [vmem:[#allocation2 + $0x2b0] sm:$0xff]
    %v190 = vld [vmem:[#allocation2 + $0x2b8] sm:$0xff]
    %v191 = vld [vmem:[#allocation2 + $0x2c0] sm:$0xff]
    %v192 = vld [vmem:[#allocation2 + $0x2c8] sm:$0xff]
    %v193 = vld [vmem:[#allocation2 + $0x2d0] sm:$0xff]
    %v194 = vld [vmem:[#allocation2 + $0x2d8] sm:$0xff]
    %v195 = vld [vmem:[#allocation2 + $0x2e0] sm:$0xff]
    %v196 = vld [vmem:[#allocation2 + $0x2e8] sm:$0xff]
    %v197 = vld [vmem:[#allocation2 + $0x2f0] sm:$0xff]
    %v198 = vld [vmem:[#allocation2 + $0x2f8] sm:$0xff]
    %v199 = vld [vmem:[#allocation2 + $0x300] sm:$0xff]
    %v200 = vld [vmem:[#allocation2 + $0x308] sm:$0xff]
    %v201 = vld [vmem:[#allocation2 + $0x310] sm:$0xff]
    %v202 = vld [vmem:[#allocation2 + $0x318] sm:$0xff]
    %v203 = vld [vmem:[#allocation2 + $0x320] sm:$0xff]
    %v204 = vld [vmem:[#allocation2 + $0x328] sm:$0xff]
    %v205 = vld [vmem:[#allocation2 + $0x330] sm:$0xff]
    %v206 = vld [vmem:[#allocation2 + $0x338] sm:$0xff]
    %v207 = vld [vmem:[#allocation2 + $0x340] sm:$0xff]
    %v208 = vld [vmem:[#allocation2 + $0x348] sm:$0xff]
    %v209 = vld [vmem:[#allocation2 + $0x350] sm:$0xff]
    %v210 = vld [vmem:[#allocation2 + $0x358] sm:$0xff]
    %v211 = vld [vmem:[#allocation2 + $0x360] sm:$0xff]
    %v212 = vld [vmem:[#allocation2 + $0x368] sm:$0xff]
    %v213 = vld [vmem:[#allocation2 + $0x370] sm:$0xff]
    %v214 = vld [vmem:[#allocation2 + $0x378] sm:$0xff]
    %v215 = vld [vmem:[#allocation2 + $0x380] sm:$0xff]
    %v216 = vld [vmem:[#allocation2 + $0x388] sm:$0xff]
    %v217 = vld [vmem:[#allocation2 + $0x390] sm:$0xff]
    %v218 = vld [vmem:[#allocation2 + $0x398] sm:$0xff]
    %v219 = vld [vmem:[#allocation2 + $0x3a0] sm:$0xff]
    %v220 = vld [vmem:[#allocation2 + $0x3a8] sm:$0xff]
    %v221 = vld [vmem:[#allocation2 + $0x3b0] sm:$0xff]
    %v222 = vld [vmem:[#allocation2 + $0x3b8] sm:$0xff]
    %v223 = vld [vmem:[#allocation2 + $0x3c0] sm:$0xff]
    %v224 = vld [vmem:[#allocation2 + $0x3c8] sm:$0xff]
    %v225 = vld [vmem:[#allocation2 + $0x3d0] sm:$0xff]
    %v226 = vld [vmem:[#allocation2 + $0x3d8] sm:$0xff]
    %v227 = vld [vmem:[#allocation2 + $0x3e0] sm:$0xff]
    %v228 = vld [vmem:[#allocation2 + $0x3e8] sm:$0xff]
    %v229 = vld [vmem:[#allocation2 + $0x3f0] sm:$0xff]
    %v230 = vld [vmem:[#allocation2 + $0x3f8] sm:$0xff]
    %v231 = vld [vmem:[#allocation2 + $0x400] sm:$0xff]
    %v232 = vld [vmem:[#allocation2 + $0x408] sm:$0xff]
    %v233 = vld [vmem:[#allocation2 + $0x410] sm:$0xff]
    %v234 = vld [vmem:[#allocation2 + $0x418] sm:$0xff]
    %v235 = vld [vmem:[#allocation2 + $0x420] sm:$0xff]
    %v236 = vld [vmem:[#allocation2 + $0x428] sm:$0xff]
    %v237 = vld [vmem:[#allocation2 + $0x430] sm:$0xff]
    %v238 = vld [vmem:[#allocation2 + $0x438] sm:$0xff]
    %v239 = vld [vmem:[#allocation2 + $0x440] sm:$0xff]
    %v240 = vld [vmem:[#allocation2 + $0x448] sm:$0xff]
    %v241 = vld [vmem:[#allocation2 + $0x450] sm:$0xff]
    %v242 = vld [vmem:[#allocation2 + $0x458] sm:$0xff]
    %v243 = vld [vmem:[#allocation2 + $0x460] sm:$0xff]
    %v244 = vld [vmem:[#allocation2 + $0x468] sm:$0xff]
    %v245 = vld [vmem:[#allocation2 + $0x470] sm:$0xff]
    %v246 = vld [vmem:[#allocation2 + $0x478] sm:$0xff]
    %v247 = vld [vmem:[#allocation2 + $0x480] sm:$0xff]
    %v248 = vld [vmem:[#allocation2 + $0x488] sm:$0xff]
    %v249 = vld [vmem:[#allocation2 + $0x490] sm:$0xff]
    %v250 = vld [vmem:[#allocation2 + $0x498] sm:$0xff]
    %v251 = vld [vmem:[#allocation2 + $0x4a0] sm:$0xff]
    %v252 = vld [vmem:[#allocation2 + $0x4a8] sm:$0xff]
    %v253 = vld [vmem:[#allocation2 + $0x4b0] sm:$0xff]
    %v254 = vld [vmem:[#allocation2 + $0x4b8] sm:$0xff]
    %v255 = vld [vmem:[#allocation2 + $0x4c0] sm:$0xff]
    %v256 = vld [vmem:[#allocation2 + $0x4c8] sm:$0xff]
    %v257 = vld [vmem:[#allocation2 + $0x4d0] sm:$0xff]
    %v258 = vld [vmem:[#allocation2 + $0x4d8] sm:$0xff]
    %v259 = vld [vmem:[#allocation2 + $0x4e0] sm:$0xff]
    %v260 = vld [vmem:[#allocation2 + $0x4e8] sm:$0xff]
    %v261 = vld [vmem:[#allocation2 + $0x4f0] sm:$0xff]
    %v262 = vld [vmem:[#allocation2 + $0x4f8] sm:$0xff]
    %v263 = vld [vmem:[#allocation2 + $0x500] sm:$0xff]
    %v264 = vld [vmem:[#allocation2 + $0x508] sm:$0xff]
    %v265 = vld [vmem:[#allocation2 + $0x510] sm:$0xff]
    %v266 = vld [vmem:[#allocation2 + $0x518] sm:$0xff]
    %v267 = vld [vmem:[#allocation2 + $0x520] sm:$0xff]
    %v268 = vld [vmem:[#allocation2 + $0x528] sm:$0xff]
    %v269 = vld [vmem:[#allocation2 + $0x530] sm:$0xff]
    %v270 = vld [vmem:[#allocation2 + $0x538] sm:$0xff]
    %v271 = vld [vmem:[#allocation2 + $0x540] sm:$0xff]
    %v272 = vld [vmem:[#allocation2 + $0x548] sm:$0xff]
    %v273 = vld [vmem:[#allocation2 + $0x550] sm:$0xff]
    %v274 = vld [vmem:[#allocation2 + $0x558] sm:$0xff]
    %v275 = vld [vmem:[#allocation2 + $0x560] sm:$0xff]
    %v276 = vld [vmem:[#allocation2 + $0x568] sm:$0xff]
    %v277 = vld [vmem:[#allocation2 + $0x570] sm:$0xff]
    %v278 = vld [vmem:[#allocation2 + $0x578] sm:$0xff]
    %v279 = vld [vmem:[#allocation2 + $0x580] sm:$0xff]
    %v280 = vld [vmem:[#allocation2 + $0x588] sm:$0xff]
    %v281 = vld [vmem:[#allocation2 + $0x590] sm:$0xff]
    %v282 = vld [vmem:[#allocation2 + $0x598] sm:$0xff]
    %v283 = vld [vmem:[#allocation2 + $0x5a0] sm:$0xff]
    %v284 = vld [vmem:[#allocation2 + $0x5a8] sm:$0xff]
    %v285 = vld [vmem:[#allocation2 + $0x5b0] sm:$0xff]
    %v286 = vld [vmem:[#allocation2 + $0x5b8] sm:$0xff]
    %v287 = vld [vmem:[#allocation2 + $0x5c0] sm:$0xff]
    %v288 = vld [vmem:[#allocation2 + $0x5c8] sm:$0xff]
    %v289 = vld [vmem:[#allocation2 + $0x5d0] sm:$0xff]
    %v290 = vld [vmem:[#allocation2 + $0x5d8] sm:$0xff]
    %v291 = vld [vmem:[#allocation2 + $0x5e0] sm:$0xff]
    %v292 = vld [vmem:[#allocation2 + $0x5e8] sm:$0xff]
    %v293 = vld [vmem:[#allocation2 + $0x5f0] sm:$0xff]
    %v294 = vld [vmem:[#allocation2 + $0x5f8] sm:$0xff]
    %v295 = vld [vmem:[#allocation2 + $0x600] sm:$0xff]
    %v296 = vld [vmem:[#allocation2 + $0x608] sm:$0xff]
    %v297 = vld [vmem:[#allocation2 + $0x610] sm:$0xff]
    %v298 = vld [vmem:[#allocation2 + $0x618] sm:$0xff]
    %v299 = vld [vmem:[%s2] sm:$0xf]
    %v301 = vlaneseq
    %v302 = vshrl.u32 %v301, 7
    %v303 = vsub.s32 0, %v302
    %v304 = vrot.slane %v299, %v303
    %v305 = vlaneseq
    %v306 = vshrl.u32 %v305, 7
    %v307 = vsub.s32 1, %v306
    %v308 = vrot.slane %v299, %v307
    %v309 = vlaneseq
    %v310 = vshrl.u32 %v309, 7
    %v311 = vsub.s32 2, %v310
    %v312 = vrot.slane %v299, %v311
    %v313 = vlaneseq
    %v314 = vshrl.u32 %v313, 7
    %v315 = vsub.s32 3, %v314
    %v316 = vrot.slane %v299, %v315
    %v517 = vunpack.c.l.b16 %v103
    %v518 = vunpack.c.h.b16 %v103
    %v519 = vunpack.c.l.b16 %v104
    %v520 = vunpack.c.h.b16 %v104
    %v521 = vunpack.c.l.b16 %v105
    %v522 = vunpack.c.h.b16 %v105
    %v523 = vunpack.c.l.b16 %v106
    %v524 = vunpack.c.h.b16 %v106
    %v525 = vunpack.c.l.b16 %v107
    %v526 = vunpack.c.h.b16 %v107
    %v527 = vunpack.c.l.b16 %v108
    %v528 = vunpack.c.h.b16 %v108
    %v529 = vunpack.c.l.b16 %v109
    %v530 = vunpack.c.h.b16 %v109
    %v531 = vunpack.c.l.b16 %v110
    %v532 = vunpack.c.h.b16 %v110
    %v533 = vunpack.c.l.b16 %v111
    %v534 = vunpack.c.h.b16 %v111
    %v535 = vunpack.c.l.b16 %v112
    %v536 = vunpack.c.h.b16 %v112
    %v537 = vunpack.c.l.b16 %v113
    %v538 = vunpack.c.h.b16 %v113
    %v539 = vunpack.c.l.b16 %v114
    %v540 = vunpack.c.h.b16 %v114
    %v541 = vunpack.c.l.b16 %v115
    %v542 = vunpack.c.h.b16 %v115
    %v543 = vunpack.c.l.b16 %v116
    %v544 = vunpack.c.h.b16 %v116
    %v545 = vunpack.c.l.b16 %v117
    %v546 = vunpack.c.h.b16 %v117
    %v547 = vunpack.c.l.b16 %v118
    %v548 = vunpack.c.h.b16 %v118
    %v549 = vunpack.c.l.b16 %v119
    %v550 = vunpack.c.h.b16 %v119
    %v551 = vunpack.c.l.b16 %v120
    %v552 = vunpack.c.h.b16 %v120
    %v553 = vunpack.c.l.b16 %v121
    %v554 = vunpack.c.h.b16 %v121
    %v555 = vunpack.c.l.b16 %v122
    %v556 = vunpack.c.h.b16 %v122
    %v557 = vunpack.c.l.b16 %v123
    %v558 = vunpack.c.h.b16 %v123
    %v559 = vunpack.c.l.b16 %v124
    %v560 = vunpack.c.h.b16 %v124
    %v561 = vunpack.c.l.b16 %v125
    %v562 = vunpack.c.h.b16 %v125
    %v563 = vunpack.c.l.b16 %v126
    %v564 = vunpack.c.h.b16 %v126
    %v565 = vunpack.c.l.b16 %v127
    %v566 = vunpack.c.h.b16 %v127
    %v567 = vunpack.c.l.b16 %v128
    %v568 = vunpack.c.h.b16 %v128
    %v569 = vunpack.c.l.b16 %v129
    %v570 = vunpack.c.h.b16 %v129
    %v571 = vunpack.c.l.b16 %v130
    %v572 = vunpack.c.h.b16 %v130
    %v573 = vunpack.c.l.b16 %v131
    %v574 = vunpack.c.h.b16 %v131
    %v575 = vunpack.c.l.b16 %v132
    %v576 = vunpack.c.h.b16 %v132
    %v577 = vunpack.c.l.b16 %v133
    %v578 = vunpack.c.h.b16 %v133
    %v579 = vunpack.c.l.b16 %v134
    %v580 = vunpack.c.h.b16 %v134
    %v581 = vunpack.c.l.b16 %v135
    %v582 = vunpack.c.h.b16 %v135
    %v583 = vunpack.c.l.b16 %v136
    %v584 = vunpack.c.h.b16 %v136
    %v585 = vunpack.c.l.b16 %v137
    %v586 = vunpack.c.h.b16 %v137
    %v587 = vunpack.c.l.b16 %v138
    %v588 = vunpack.c.h.b16 %v138
    %v589 = vunpack.c.l.b16 %v139
    %v590 = vunpack.c.h.b16 %v139
    %v591 = vunpack.c.l.b16 %v140
    %v592 = vunpack.c.h.b16 %v140
    %v593 = vunpack.c.l.b16 %v141
    %v594 = vunpack.c.h.b16 %v141
    %v595 = vunpack.c.l.b16 %v142
    %v596 = vunpack.c.h.b16 %v142
    %v597 = vunpack.c.l.b16 %v143
    %v598 = vunpack.c.h.b16 %v143
    %v599 = vunpack.c.l.b16 %v144
    %v600 = vunpack.c.h.b16 %v144
    %v601 = vunpack.c.l.b16 %v145
    %v602 = vunpack.c.h.b16 %v145
    %v603 = vunpack.c.l.b16 %v146
    %v604 = vunpack.c.h.b16 %v146
    %v605 = vunpack.c.l.b16 %v147
    %v606 = vunpack.c.h.b16 %v147
    %v607 = vunpack.c.l.b16 %v148
    %v608 = vunpack.c.h.b16 %v148
    %v609 = vunpack.c.l.b16 %v149
    %v610 = vunpack.c.h.b16 %v149
    %v611 = vunpack.c.l.b16 %v150
    %v612 = vunpack.c.h.b16 %v150
    %v613 = vunpack.c.l.b16 %v151
    %v614 = vunpack.c.h.b16 %v151
    %v615 = vunpack.c.l.b16 %v152
    %v616 = vunpack.c.h.b16 %v152
    %v617 = vunpack.c.l.b16 %v153
    %v618 = vunpack.c.h.b16 %v153
    %v619 = vunpack.c.l.b16 %v154
    %v620 = vunpack.c.h.b16 %v154
    %v621 = vunpack.c.l.b16 %v155
    %v622 = vunpack.c.h.b16 %v155
    %v623 = vunpack.c.l.b16 %v156
    %v624 = vunpack.c.h.b16 %v156
    %v625 = vunpack.c.l.b16 %v157
    %v626 = vunpack.c.h.b16 %v157
    %v627 = vunpack.c.l.b16 %v158
    %v628 = vunpack.c.h.b16 %v158
    %v629 = vunpack.c.l.b16 %v159
    %v630 = vunpack.c.h.b16 %v159
    %v631 = vunpack.c.l.b16 %v160
    %v632 = vunpack.c.h.b16 %v160
    %v633 = vunpack.c.l.b16 %v161
    %v634 = vunpack.c.h.b16 %v161
    %v635 = vunpack.c.l.b16 %v162
    %v636 = vunpack.c.h.b16 %v162
    %v637 = vunpack.c.l.b16 %v163
    %v638 = vunpack.c.h.b16 %v163
    %v639 = vunpack.c.l.b16 %v164
    %v640 = vunpack.c.h.b16 %v164
    %v641 = vunpack.c.l.b16 %v165
    %v642 = vunpack.c.h.b16 %v165
    %v643 = vunpack.c.l.b16 %v166
    %v644 = vunpack.c.h.b16 %v166
    %v645 = vunpack.c.l.b16 %v167
    %v646 = vunpack.c.h.b16 %v167
    %v647 = vunpack.c.l.b16 %v168
    %v648 = vunpack.c.h.b16 %v168
    %v649 = vunpack.c.l.b16 %v169
    %v650 = vunpack.c.h.b16 %v169
    %v651 = vunpack.c.l.b16 %v170
    %v652 = vunpack.c.h.b16 %v170
    %v653 = vunpack.c.l.b16 %v171
    %v654 = vunpack.c.h.b16 %v171
    %v655 = vunpack.c.l.b16 %v172
    %v656 = vunpack.c.h.b16 %v172
    %v657 = vunpack.c.l.b16 %v173
    %v658 = vunpack.c.h.b16 %v173
    %v659 = vunpack.c.l.b16 %v174
    %v660 = vunpack.c.h.b16 %v174
    %v661 = vunpack.c.l.b16 %v175
    %v662 = vunpack.c.h.b16 %v175
    %v663 = vunpack.c.l.b16 %v176
    %v664 = vunpack.c.h.b16 %v176
    %v665 = vunpack.c.l.b16 %v177
    %v666 = vunpack.c.h.b16 %v177
    %v667 = vunpack.c.l.b16 %v178
    %v668 = vunpack.c.h.b16 %v178
    %v669 = vunpack.c.l.b16 %v179
    %v670 = vunpack.c.h.b16 %v179
    %v671 = vunpack.c.l.b16 %v180
    %v672 = vunpack.c.h.b16 %v180
    %v673 = vunpack.c.l.b16 %v181
    %v674 = vunpack.c.h.b16 %v181
    %v675 = vunpack.c.l.b16 %v182
    %v676 = vunpack.c.h.b16 %v182
    %v677 = vunpack.c.l.b16 %v183
    %v678 = vunpack.c.h.b16 %v183
    %v679 = vunpack.c.l.b16 %v184
    %v680 = vunpack.c.h.b16 %v184
    %v681 = vunpack.c.l.b16 %v185
    %v682 = vunpack.c.h.b16 %v185
    %v683 = vunpack.c.l.b16 %v186
    %v684 = vunpack.c.h.b16 %v186
    %v685 = vunpack.c.l.b16 %v187
    %v686 = vunpack.c.h.b16 %v187
    %v687 = vunpack.c.l.b16 %v188
    %v688 = vunpack.c.h.b16 %v188
    %v689 = vunpack.c.l.b16 %v189
    %v690 = vunpack.c.h.b16 %v189
    %v691 = vunpack.c.l.b16 %v190
    %v692 = vunpack.c.h.b16 %v190
    %v693 = vunpack.c.l.b16 %v191
    %v694 = vunpack.c.h.b16 %v191
    %v695 = vunpack.c.l.b16 %v192
    %v696 = vunpack.c.h.b16 %v192
    %v697 = vunpack.c.l.b16 %v193
    %v698 = vunpack.c.h.b16 %v193
    %v699 = vunpack.c.l.b16 %v194
    %v700 = vunpack.c.h.b16 %v194
    %v701 = vunpack.c.l.b16 %v195
    %v702 = vunpack.c.h.b16 %v195
    %v703 = vunpack.c.l.b16 %v196
    %v704 = vunpack.c.h.b16 %v196
    %v705 = vunpack.c.l.b16 %v197
    %v706 = vunpack.c.h.b16 %v197
    %v707 = vunpack.c.l.b16 %v198
    %v708 = vunpack.c.h.b16 %v198
    %v709 = vunpack.c.l.b16 %v199
    %v710 = vunpack.c.h.b16 %v199
    %v711 = vunpack.c.l.b16 %v200
    %v712 = vunpack.c.h.b16 %v200
    %v713 = vunpack.c.l.b16 %v201
    %v714 = vunpack.c.h.b16 %v201
    %v715 = vunpack.c.l.b16 %v202
    %v716 = vunpack.c.h.b16 %v202
    %v717 = vunpack.c.l.b16 %v203
    %v718 = vunpack.c.h.b16 %v203
    %v719 = vunpack.c.l.b16 %v204
    %v720 = vunpack.c.h.b16 %v204
    %v721 = vunpack.c.l.b16 %v205
    %v722 = vunpack.c.h.b16 %v205
    %v723 = vunpack.c.l.b16 %v206
    %v724 = vunpack.c.h.b16 %v206
    %v725 = vunpack.c.l.b16 %v207
    %v726 = vunpack.c.h.b16 %v207
    %v727 = vunpack.c.l.b16 %v208
    %v728 = vunpack.c.h.b16 %v208
    %v729 = vunpack.c.l.b16 %v209
    %v730 = vunpack.c.h.b16 %v209
    %v731 = vunpack.c.l.b16 %v210
    %v732 = vunpack.c.h.b16 %v210
    %v733 = vunpack.c.l.b16 %v211
    %v734 = vunpack.c.h.b16 %v211
    %v735 = vunpack.c.l.b16 %v212
    %v736 = vunpack.c.h.b16 %v212
    %v737 = vunpack.c.l.b16 %v213
    %v738 = vunpack.c.h.b16 %v213
    %v739 = vunpack.c.l.b16 %v214
    %v740 = vunpack.c.h.b16 %v214
    %v741 = vunpack.c.l.b16 %v215
    %v742 = vunpack.c.h.b16 %v215
    %v743 = vunpack.c.l.b16 %v216
    %v744 = vunpack.c.h.b16 %v216
    %v745 = vunpack.c.l.b16 %v217
    %v746 = vunpack.c.h.b16 %v217
    %v747 = vunpack.c.l.b16 %v218
    %v748 = vunpack.c.h.b16 %v218
    %v749 = vunpack.c.l.b16 %v219
    %v750 = vunpack.c.h.b16 %v219
    %v751 = vunpack.c.l.b16 %v220
    %v752 = vunpack.c.h.b16 %v220
    %v753 = vunpack.c.l.b16 %v221
    %v754 = vunpack.c.h.b16 %v221
    %v755 = vunpack.c.l.b16 %v222
    %v756 = vunpack.c.h.b16 %v222
    %v757 = vunpack.c.l.b16 %v223
    %v758 = vunpack.c.h.b16 %v223
    %v759 = vunpack.c.l.b16 %v224
    %v760 = vunpack.c.h.b16 %v224
    %v761 = vunpack.c.l.b16 %v225
    %v762 = vunpack.c.h.b16 %v225
    %v763 = vunpack.c.l.b16 %v226
    %v764 = vunpack.c.h.b16 %v226
    %v765 = vunpack.c.l.b16 %v227
    %v766 = vunpack.c.h.b16 %v227
    %v767 = vunpack.c.l.b16 %v228
    %v768 = vunpack.c.h.b16 %v228
    %v769 = vunpack.c.l.b16 %v229
    %v770 = vunpack.c.h.b16 %v229
    %v771 = vunpack.c.l.b16 %v230
    %v772 = vunpack.c.h.b16 %v230
    %v773 = vunpack.c.l.b16 %v231
    %v774 = vunpack.c.h.b16 %v231
    %v775 = vunpack.c.l.b16 %v232
    %v776 = vunpack.c.h.b16 %v232
    %v777 = vunpack.c.l.b16 %v233
    %v778 = vunpack.c.h.b16 %v233
    %v779 = vunpack.c.l.b16 %v234
    %v780 = vunpack.c.h.b16 %v234
    %v781 = vunpack.c.l.b16 %v235
    %v782 = vunpack.c.h.b16 %v235
    %v783 = vunpack.c.l.b16 %v236
    %v784 = vunpack.c.h.b16 %v236
    %v785 = vunpack.c.l.b16 %v237
    %v786 = vunpack.c.h.b16 %v237
    %v787 = vunpack.c.l.b16 %v238
    %v788 = vunpack.c.h.b16 %v238
    %v789 = vunpack.c.l.b16 %v239
    %v790 = vunpack.c.h.b16 %v239
    %v791 = vunpack.c.l.b16 %v240
    %v792 = vunpack.c.h.b16 %v240
    %v793 = vunpack.c.l.b16 %v241
    %v794 = vunpack.c.h.b16 %v241
    %v795 = vunpack.c.l.b16 %v242
    %v796 = vunpack.c.h.b16 %v242
    %v797 = vunpack.c.l.b16 %v243
    %v798 = vunpack.c.h.b16 %v243
    %v799 = vunpack.c.l.b16 %v244
    %v800 = vunpack.c.h.b16 %v244
    %v801 = vunpack.c.l.b16 %v245
    %v802 = vunpack.c.h.b16 %v245
    %v803 = vunpack.c.l.b16 %v246
    %v804 = vunpack.c.h.b16 %v246
    %v805 = vunpack.c.l.b16 %v247
    %v806 = vunpack.c.h.b16 %v247
    %v807 = vunpack.c.l.b16 %v248
    %v808 = vunpack.c.h.b16 %v248
    %v809 = vunpack.c.l.b16 %v249
    %v810 = vunpack.c.h.b16 %v249
    %v811 = vunpack.c.l.b16 %v250
    %v812 = vunpack.c.h.b16 %v250
    %v813 = vunpack.c.l.b16 %v251
    %v814 = vunpack.c.h.b16 %v251
    %v815 = vunpack.c.l.b16 %v252
    %v816 = vunpack.c.h.b16 %v252
    %v817 = vunpack.c.l.b16 %v253
    %v818 = vunpack.c.h.b16 %v253
    %v819 = vunpack.c.l.b16 %v254
    %v820 = vunpack.c.h.b16 %v254
    %v821 = vunpack.c.l.b16 %v255
    %v822 = vunpack.c.h.b16 %v255
    %v823 = vunpack.c.l.b16 %v256
    %v824 = vunpack.c.h.b16 %v256
    %v825 = vunpack.c.l.b16 %v257
    %v826 = vunpack.c.h.b16 %v257
    %v827 = vunpack.c.l.b16 %v258
    %v828 = vunpack.c.h.b16 %v258
    %v829 = vunpack.c.l.b16 %v259
    %v830 = vunpack.c.h.b16 %v259
    %v831 = vunpack.c.l.b16 %v260
    %v832 = vunpack.c.h.b16 %v260
    %v833 = vunpack.c.l.b16 %v261
    %v834 = vunpack.c.h.b16 %v261
    %v835 = vunpack.c.l.b16 %v262
    %v836 = vunpack.c.h.b16 %v262
    %v837 = vunpack.c.l.b16 %v263
    %v838 = vunpack.c.h.b16 %v263
    %v839 = vunpack.c.l.b16 %v264
    %v840 = vunpack.c.h.b16 %v264
    %v841 = vunpack.c.l.b16 %v265
    %v842 = vunpack.c.h.b16 %v265
    %v843 = vunpack.c.l.b16 %v266
    %v844 = vunpack.c.h.b16 %v266
    %v845 = vunpack.c.l.b16 %v267
    %v846 = vunpack.c.h.b16 %v267
    %v847 = vunpack.c.l.b16 %v268
    %v848 = vunpack.c.h.b16 %v268
    %v849 = vunpack.c.l.b16 %v269
    %v850 = vunpack.c.h.b16 %v269
    %v851 = vunpack.c.l.b16 %v270
    %v852 = vunpack.c.h.b16 %v270
    %v853 = vunpack.c.l.b16 %v271
    %v854 = vunpack.c.h.b16 %v271
    %v855 = vunpack.c.l.b16 %v272
    %v856 = vunpack.c.h.b16 %v272
    %v857 = vunpack.c.l.b16 %v273
    %v858 = vunpack.c.h.b16 %v273
    %v859 = vunpack.c.l.b16 %v274
    %v860 = vunpack.c.h.b16 %v274
    %v861 = vunpack.c.l.b16 %v275
    %v862 = vunpack.c.h.b16 %v275
    %v863 = vunpack.c.l.b16 %v276
    %v864 = vunpack.c.h.b16 %v276
    %v865 = vunpack.c.l.b16 %v277
    %v866 = vunpack.c.h.b16 %v277
    %v867 = vunpack.c.l.b16 %v278
    %v868 = vunpack.c.h.b16 %v278
    %v869 = vunpack.c.l.b16 %v279
    %v870 = vunpack.c.h.b16 %v279
    %v871 = vunpack.c.l.b16 %v280
    %v872 = vunpack.c.h.b16 %v280
    %v873 = vunpack.c.l.b16 %v281
    %v874 = vunpack.c.h.b16 %v281
    %v875 = vunpack.c.l.b16 %v282
    %v876 = vunpack.c.h.b16 %v282
    %v877 = vunpack.c.l.b16 %v283
    %v878 = vunpack.c.h.b16 %v283
    %v879 = vunpack.c.l.b16 %v284
    %v880 = vunpack.c.h.b16 %v284
    %v881 = vunpack.c.l.b16 %v285
    %v882 = vunpack.c.h.b16 %v285
    %v883 = vunpack.c.l.b16 %v286
    %v884 = vunpack.c.h.b16 %v286
    %v885 = vunpack.c.l.b16 %v287
    %v886 = vunpack.c.h.b16 %v287
    %v887 = vunpack.c.l.b16 %v288
    %v888 = vunpack.c.h.b16 %v288
    %v889 = vunpack.c.l.b16 %v289
    %v890 = vunpack.c.h.b16 %v289
    %v891 = vunpack.c.l.b16 %v290
    %v892 = vunpack.c.h.b16 %v290
    %v893 = vunpack.c.l.b16 %v291
    %v894 = vunpack.c.h.b16 %v291
    %v895 = vunpack.c.l.b16 %v292
    %v896 = vunpack.c.h.b16 %v292
    %v897 = vunpack.c.l.b16 %v293
    %v898 = vunpack.c.h.b16 %v293
    %v899 = vunpack.c.l.b16 %v294
    %v900 = vunpack.c.h.b16 %v294
    %v901 = vunpack.c.l.b16 %v295
    %v902 = vunpack.c.h.b16 %v295
    %v903 = vunpack.c.l.b16 %v296
    %v904 = vunpack.c.h.b16 %v296
    %v905 = vunpack.c.l.b16 %v297
    %v906 = vunpack.c.h.b16 %v297
    %v907 = vunpack.c.l.b16 %v298
    %v908 = vunpack.c.h.b16 %v298
    %v909 = vpack.c.b16 %v521, %v517
    %v910 = vpack.c.b16 %v522, %v518
    %v911 = vpack.c.b16 %v523, %v519
    %v912 = vpack.c.b16 %v524, %v520
    %v913 = vpack.c.b16 %v529, %v525
    %v914 = vpack.c.b16 %v530, %v526
    %v915 = vpack.c.b16 %v531, %v527
    %v916 = vpack.c.b16 %v532, %v528
    %v917 = vpack.c.b16 %v537, %v533
    %v918 = vpack.c.b16 %v538, %v534
    %v919 = vpack.c.b16 %v539, %v535
    %v920 = vpack.c.b16 %v540, %v536
    %v921 = vpack.c.b16 %v545, %v541
    %v922 = vpack.c.b16 %v546, %v542
    %v923 = vpack.c.b16 %v547, %v543
    %v924 = vpack.c.b16 %v548, %v544
    %v925 = vpack.c.b16 %v553, %v549
    %v926 = vpack.c.b16 %v554, %v550
    %v927 = vpack.c.b16 %v555, %v551
    %v928 = vpack.c.b16 %v556, %v552
    %v929 = vpack.c.b16 %v561, %v557
    %v930 = vpack.c.b16 %v562, %v558
    %v931 = vpack.c.b16 %v563, %v559
    %v932 = vpack.c.b16 %v564, %v560
    %v933 = vpack.c.b16 %v569, %v565
    %v934 = vpack.c.b16 %v570, %v566
    %v935 = vpack.c.b16 %v571, %v567
    %v936 = vpack.c.b16 %v572, %v568
    %v937 = vpack.c.b16 %v577, %v573
    %v938 = vpack.c.b16 %v578, %v574
    %v939 = vpack.c.b16 %v579, %v575
    %v940 = vpack.c.b16 %v580, %v576
    %v941 = vpack.c.b16 %v585, %v581
    %v942 = vpack.c.b16 %v586, %v582
    %v943 = vpack.c.b16 %v587, %v583
    %v944 = vpack.c.b16 %v588, %v584
    %v945 = vpack.c.b16 %v593, %v589
    %v946 = vpack.c.b16 %v594, %v590
    %v947 = vpack.c.b16 %v595, %v591
    %v948 = vpack.c.b16 %v596, %v592
    %v949 = vpack.c.b16 %v601, %v597
    %v950 = vpack.c.b16 %v602, %v598
    %v951 = vpack.c.b16 %v603, %v599
    %v952 = vpack.c.b16 %v604, %v600
    %v953 = vpack.c.b16 %v609, %v605
    %v954 = vpack.c.b16 %v610, %v606
    %v955 = vpack.c.b16 %v611, %v607
    %v956 = vpack.c.b16 %v612, %v608
    %v957 = vpack.c.b16 %v617, %v613
    %v958 = vpack.c.b16 %v618, %v614
    %v959 = vpack.c.b16 %v619, %v615
    %v960 = vpack.c.b16 %v620, %v616
    %v961 = vpack.c.b16 %v625, %v621
    %v962 = vpack.c.b16 %v626, %v622
    %v963 = vpack.c.b16 %v627, %v623
    %v964 = vpack.c.b16 %v628, %v624
    %v965 = vpack.c.b16 %v633, %v629
    %v966 = vpack.c.b16 %v634, %v630
    %v967 = vpack.c.b16 %v635, %v631
    %v968 = vpack.c.b16 %v636, %v632
    %v969 = vpack.c.b16 %v641, %v637
    %v970 = vpack.c.b16 %v642, %v638
    %v971 = vpack.c.b16 %v643, %v639
    %v972 = vpack.c.b16 %v644, %v640
    %v973 = vpack.c.b16 %v649, %v645
    %v974 = vpack.c.b16 %v650, %v646
    %v975 = vpack.c.b16 %v651, %v647
    %v976 = vpack.c.b16 %v652, %v648
    %v977 = vpack.c.b16 %v657, %v653
    %v978 = vpack.c.b16 %v658, %v654
    %v979 = vpack.c.b16 %v659, %v655
    %v980 = vpack.c.b16 %v660, %v656
    %v981 = vpack.c.b16 %v665, %v661
    %v982 = vpack.c.b16 %v666, %v662
    %v983 = vpack.c.b16 %v667, %v663
    %v984 = vpack.c.b16 %v668, %v664
    %v985 = vpack.c.b16 %v673, %v669
    %v986 = vpack.c.b16 %v674, %v670
    %v987 = vpack.c.b16 %v675, %v671
    %v988 = vpack.c.b16 %v676, %v672
    %v989 = vpack.c.b16 %v681, %v677
    %v990 = vpack.c.b16 %v682, %v678
    %v991 = vpack.c.b16 %v683, %v679
    %v992 = vpack.c.b16 %v684, %v680
    %v993 = vpack.c.b16 %v689, %v685
    %v994 = vpack.c.b16 %v690, %v686
    %v995 = vpack.c.b16 %v691, %v687
    %v996 = vpack.c.b16 %v692, %v688
    %v997 = vpack.c.b16 %v697, %v693
    %v998 = vpack.c.b16 %v698, %v694
    %v999 = vpack.c.b16 %v699, %v695
    %v1000 = vpack.c.b16 %v700, %v696
    %v1001 = vpack.c.b16 %v705, %v701
    %v1002 = vpack.c.b16 %v706, %v702
    %v1003 = vpack.c.b16 %v707, %v703
    %v1004 = vpack.c.b16 %v708, %v704
    %v1005 = vpack.c.b16 %v713, %v709
    %v1006 = vpack.c.b16 %v714, %v710
    %v1007 = vpack.c.b16 %v715, %v711
    %v1008 = vpack.c.b16 %v716, %v712
    %v1009 = vpack.c.b16 %v721, %v717
    %v1010 = vpack.c.b16 %v722, %v718
    %v1011 = vpack.c.b16 %v723, %v719
    %v1012 = vpack.c.b16 %v724, %v720
    %v1013 = vpack.c.b16 %v729, %v725
    %v1014 = vpack.c.b16 %v730, %v726
    %v1015 = vpack.c.b16 %v731, %v727
    %v1016 = vpack.c.b16 %v732, %v728
    %v1017 = vpack.c.b16 %v737, %v733
    %v1018 = vpack.c.b16 %v738, %v734
    %v1019 = vpack.c.b16 %v739, %v735
    %v1020 = vpack.c.b16 %v740, %v736
    %v1021 = vpack.c.b16 %v745, %v741
    %v1022 = vpack.c.b16 %v746, %v742
    %v1023 = vpack.c.b16 %v747, %v743
    %v1024 = vpack.c.b16 %v748, %v744
    %v1025 = vpack.c.b16 %v753, %v749
    %v1026 = vpack.c.b16 %v754, %v750
    %v1027 = vpack.c.b16 %v755, %v751
    %v1028 = vpack.c.b16 %v756, %v752
    %v1029 = vpack.c.b16 %v761, %v757
    %v1030 = vpack.c.b16 %v762, %v758
    %v1031 = vpack.c.b16 %v763, %v759
    %v1032 = vpack.c.b16 %v764, %v760
    %v1033 = vpack.c.b16 %v769, %v765
    %v1034 = vpack.c.b16 %v770, %v766
    %v1035 = vpack.c.b16 %v771, %v767
    %v1036 = vpack.c.b16 %v772, %v768
    %v1037 = vpack.c.b16 %v777, %v773
    %v1038 = vpack.c.b16 %v778, %v774
    %v1039 = vpack.c.b16 %v779, %v775
    %v1040 = vpack.c.b16 %v780, %v776
    %v1041 = vpack.c.b16 %v785, %v781
    %v1042 = vpack.c.b16 %v786, %v782
    %v1043 = vpack.c.b16 %v787, %v783
    %v1044 = vpack.c.b16 %v788, %v784
    %v1045 = vpack.c.b16 %v793, %v789
    %v1046 = vpack.c.b16 %v794, %v790
    %v1047 = vpack.c.b16 %v795, %v791
    %v1048 = vpack.c.b16 %v796, %v792
    %v1049 = vpack.c.b16 %v801, %v797
    %v1050 = vpack.c.b16 %v802, %v798
    %v1051 = vpack.c.b16 %v803, %v799
    %v1052 = vpack.c.b16 %v804, %v800
    %v1053 = vpack.c.b16 %v809, %v805
    %v1054 = vpack.c.b16 %v810, %v806
    %v1055 = vpack.c.b16 %v811, %v807
    %v1056 = vpack.c.b16 %v812, %v808
    %v1057 = vpack.c.b16 %v817, %v813
    %v1058 = vpack.c.b16 %v818, %v814
    %v1059 = vpack.c.b16 %v819, %v815
    %v1060 = vpack.c.b16 %v820, %v816
    %v1061 = vpack.c.b16 %v825, %v821
    %v1062 = vpack.c.b16 %v826, %v822
    %v1063 = vpack.c.b16 %v827, %v823
    %v1064 = vpack.c.b16 %v828, %v824
    %v1065 = vpack.c.b16 %v833, %v829
    %v1066 = vpack.c.b16 %v834, %v830
    %v1067 = vpack.c.b16 %v835, %v831
    %v1068 = vpack.c.b16 %v836, %v832
    %v1069 = vpack.c.b16 %v841, %v837
    %v1070 = vpack.c.b16 %v842, %v838
    %v1071 = vpack.c.b16 %v843, %v839
    %v1072 = vpack.c.b16 %v844, %v840
    %v1073 = vpack.c.b16 %v849, %v845
    %v1074 = vpack.c.b16 %v850, %v846
    %v1075 = vpack.c.b16 %v851, %v847
    %v1076 = vpack.c.b16 %v852, %v848
    %v1077 = vpack.c.b16 %v857, %v853
    %v1078 = vpack.c.b16 %v858, %v854
    %v1079 = vpack.c.b16 %v859, %v855
    %v1080 = vpack.c.b16 %v860, %v856
    %v1081 = vpack.c.b16 %v865, %v861
    %v1082 = vpack.c.b16 %v866, %v862
    %v1083 = vpack.c.b16 %v867, %v863
    %v1084 = vpack.c.b16 %v868, %v864
    %v1085 = vpack.c.b16 %v873, %v869
    %v1086 = vpack.c.b16 %v874, %v870
    %v1087 = vpack.c.b16 %v875, %v871
    %v1088 = vpack.c.b16 %v876, %v872
    %v1089 = vpack.c.b16 %v881, %v877
    %v1090 = vpack.c.b16 %v882, %v878
    %v1091 = vpack.c.b16 %v883, %v879
    %v1092 = vpack.c.b16 %v884, %v880
    %v1093 = vpack.c.b16 %v889, %v885
    %v1094 = vpack.c.b16 %v890, %v886
    %v1095 = vpack.c.b16 %v891, %v887
    %v1096 = vpack.c.b16 %v892, %v888
    %v1097 = vpack.c.b16 %v897, %v893
    %v1098 = vpack.c.b16 %v898, %v894
    %v1099 = vpack.c.b16 %v899, %v895
    %v1100 = vpack.c.b16 %v900, %v896
    %v1101 = vpack.c.b16 %v905, %v901
    %v1102 = vpack.c.b16 %v906, %v902
    %v1103 = vpack.c.b16 %v907, %v903
    %v1104 = vpack.c.b16 %v908, %v904
    %vm1301 = vcmask 130048
    %v1303 = vsel %vm1301, %v95, 0
    %v1306 = vsel %vm1301, %v102, 0
    %1308 = vmatprep.subr.bf16.mxu0 %v910
    %1309 = vmatpush1.bf16.msra.mxu0 %v909
    %1310 = vmatprep.subr.bf16.mxu0 %v914
    %1311 = vmatpush1.bf16.msra.mxu0 %v913
    %1312 = vmatprep.subr.bf16.mxu0 %v918
    %1313 = vmatpush1.bf16.msra.mxu0 %v917
    %1314 = vmatprep.subr.bf16.mxu0 %v922
    %1315 = vmatpush1.bf16.msra.mxu0 %v921
    %1316 = vmatprep.subr.bf16.mxu0 %v926
    %1317 = vmatpush1.bf16.msra.mxu0 %v925
    %1318 = vmatprep.subr.bf16.mxu0 %v930
    %1319 = vmatpush1.bf16.msra.mxu0 %v929
    %1320 = vmatprep.subr.bf16.mxu0 %v934
    %1321 = vmatpush1.bf16.msra.mxu0 %v933
    %1322 = vmatprep.subr.bf16.mxu0 %v938
    %1323 = vmatpush1.bf16.msra.mxu0 %v937
    %1324 = vmatprep.subr.bf16.mxu0 %v942
    %1325 = vmatpush1.bf16.msra.mxu0 %v941
    %1326 = vmatprep.subr.bf16.mxu0 %v946
    %1327 = vmatpush1.bf16.msra.mxu0 %v945
    %1328 = vmatprep.subr.bf16.mxu0 %v950
    %1329 = vmatpush1.bf16.msra.mxu0 %v949
    %1330 = vmatprep.subr.bf16.mxu0 %v954
    %1331 = vmatpush1.bf16.msra.mxu0 %v953
    %1332 = vmatprep.subr.bf16.mxu0 %v958
    %1333 = vmatpush1.bf16.msra.mxu0 %v957
    %1334 = vmatprep.subr.bf16.mxu0 %v962
    %1335 = vmatpush1.bf16.msra.mxu0 %v961
    %1336 = vmatprep.subr.bf16.mxu0 %v966
    %1337 = vmatpush1.bf16.msra.mxu0 %v965
    %1338 = vmatprep.subr.bf16.mxu0 %v970
    %1339 = vmatpush1.bf16.msra.mxu0 %v969
    %1340 = vmatprep.mubr.bf16.mxu0 %v90
    %1341 = vmatmul.mubr.bf16.gmra.mrb[0].mxu0 %v89
    %v1342 = vpop.f32.mrb[0].mxu0
    %v1343 = vadd.f32 %v304, %v1342
    %v1344 = vpop.f32.mrb[0].mxu0
    %v1345 = vadd.f32 %v308, %v1344
    %v1346 = vpop.f32.mrb[0].mxu0
    %v1347 = vadd.f32 %v304, %v1346
    %v1348 = vpop.f32.mrb[0].mxu0
    %v1349 = vadd.f32 %v308, %v1348
    %1350 = vmatprep.mubr.bf16.mxu0 %v97
    %1351 = vmatmul.mubr.bf16.gmra.mrb[0].mxu0 %v96
    %v1352 = vpop.f32.mrb[0].mxu0
    %v1353 = vadd.f32 %v304, %v1352
    %v1354 = vpop.f32.mrb[0].mxu0
    %v1355 = vadd.f32 %v308, %v1354
    %v1356 = vpop.f32.mrb[0].mxu0
    %v1357 = vadd.f32 %v304, %v1356
    %v1358 = vpop.f32.mrb[0].mxu0
    %v1359 = vadd.f32 %v308, %v1358
    %1360 = vdwg.mxu0
    %1361 = vmatprep.subr.bf16.mxu0 %v974
    %1362 = vmatpush1.bf16.msra.mxu0 %v973
    %1363 = vmatprep.subr.bf16.mxu0 %v978
    %1364 = vmatpush1.bf16.msra.mxu0 %v977
    %1365 = vmatprep.subr.bf16.mxu0 %v982
    %1366 = vmatpush1.bf16.msra.mxu0 %v981
    %1367 = vmatprep.subr.bf16.mxu0 %v986
    %1368 = vmatpush1.bf16.msra.mxu0 %v985
    %1369 = vmatprep.subr.bf16.mxu0 %v990
    %1370 = vmatpush1.bf16.msra.mxu0 %v989
    %1371 = vmatprep.subr.bf16.mxu0 %v994
    %1372 = vmatpush1.bf16.msra.mxu0 %v993
    %1373 = vmatprep.subr.bf16.mxu0 %v998
    %1374 = vmatpush1.bf16.msra.mxu0 %v997
    %1375 = vmatprep.subr.bf16.mxu0 %v1002
    %1376 = vmatpush1.bf16.msra.mxu0 %v1001
    %1377 = vmatprep.subr.bf16.mxu0 %v1006
    %1378 = vmatpush1.bf16.msra.mxu0 %v1005
    %1379 = vmatprep.subr.bf16.mxu0 %v1010
    %1380 = vmatpush1.bf16.msra.mxu0 %v1009
    %1381 = vmatprep.subr.bf16.mxu0 %v1014
    %1382 = vmatpush1.bf16.msra.mxu0 %v1013
    %1383 = vmatprep.subr.bf16.mxu0 %v1018
    %1384 = vmatpush1.bf16.msra.mxu0 %v1017
    %1385 = vmatprep.subr.bf16.mxu0 %v1022
    %1386 = vmatpush1.bf16.msra.mxu0 %v1021
    %1387 = vmatprep.subr.bf16.mxu0 %v1026
    %1388 = vmatpush1.bf16.msra.mxu0 %v1025
    %1389 = vmatprep.subr.bf16.mxu0 %v1030
    %1390 = vmatpush1.bf16.msra.mxu0 %v1029
    %1391 = vmatprep.subr.bf16.mxu0 %v1034
    %1392 = vmatpush1.bf16.msra.mxu0 %v1033
    %1393 = vmatprep.mubr.bf16.mxu0 %v92
    %1394 = vmatmul.mubr.bf16.gmra.mrb[0].mxu0 %v91
    %v1395 = vpop.f32.mrb[0].mxu0
    %v1396 = vadd.f32 %v1343, %v1395
    %v1397 = vpop.f32.mrb[0].mxu0
    %v1398 = vadd.f32 %v1345, %v1397
    %v1399 = vpop.f32.mrb[0].mxu0
    %v1400 = vadd.f32 %v1347, %v1399
    %v1401 = vpop.f32.mrb[0].mxu0
    %v1402 = vadd.f32 %v1349, %v1401
    %1403 = vmatprep.mubr.bf16.mxu0 %v99
    %1404 = vmatmul.mubr.bf16.gmra.mrb[0].mxu0 %v98
    %v1405 = vpop.f32.mrb[0].mxu0
    %v1406 = vadd.f32 %v1353, %v1405
    %v1407 = vpop.f32.mrb[0].mxu0
    %v1408 = vadd.f32 %v1355, %v1407
    %v1409 = vpop.f32.mrb[0].mxu0
    %v1410 = vadd.f32 %v1357, %v1409
    %v1411 = vpop.f32.mrb[0].mxu0
    %v1412 = vadd.f32 %v1359, %v1411
    %1413 = vdwg.mxu0
    %1414 = vmatprep.subr.bf16.mxu0 %v1038
    %1415 = vmatpush1.bf16.msra.mxu0 %v1037
    %1416 = vmatprep.subr.bf16.mxu0 %v1042
    %1417 = vmatpush1.bf16.msra.mxu0 %v1041
    %1418 = vmatprep.subr.bf16.mxu0 %v1046
    %1419 = vmatpush1.bf16.msra.mxu0 %v1045
    %1420 = vmatprep.subr.bf16.mxu0 %v1050
    %1421 = vmatpush1.bf16.msra.mxu0 %v1049
    %1422 = vmatprep.subr.bf16.mxu0 %v1054
    %1423 = vmatpush1.bf16.msra.mxu0 %v1053
    %1424 = vmatprep.subr.bf16.mxu0 %v1058
    %1425 = vmatpush1.bf16.msra.mxu0 %v1057
    %1426 = vmatprep.subr.bf16.mxu0 %v1062
    %1427 = vmatpush1.bf16.msra.mxu0 %v1061
    %1428 = vmatprep.subr.bf16.mxu0 %v1066
    %1429 = vmatpush1.bf16.msra.mxu0 %v1065
    %1430 = vmatprep.subr.bf16.mxu0 %v1070
    %1431 = vmatpush1.bf16.msra.mxu0 %v1069
    %1432 = vmatprep.subr.bf16.mxu0 %v1074
    %1433 = vmatpush1.bf16.msra.mxu0 %v1073
    %1434 = vmatprep.subr.bf16.mxu0 %v1078
    %1435 = vmatpush1.bf16.msra.mxu0 %v1077
    %1436 = vmatprep.subr.bf16.mxu0 %v1082
    %1437 = vmatpush1.bf16.msra.mxu0 %v1081
    %1438 = vmatprep.subr.bf16.mxu0 %v1086
    %1439 = vmatpush1.bf16.msra.mxu0 %v1085
    %1440 = vmatprep.subr.bf16.mxu0 %v1090
    %1441 = vmatpush1.bf16.msra.mxu0 %v1089
    %1442 = vmatprep.subr.bf16.mxu0 %v1094
    %1443 = vmatpush1.bf16.msra.mxu0 %v1093
    %1444 = vmatprep.subr.bf16.mxu0 %v1098
    %1445 = vmatpush1.bf16.msra.mxu0 %v1097
    %1446 = vmatprep.mubr.bf16.mxu0 %v94
    %1447 = vmatmul.mubr.bf16.gmra.mrb[0].mxu0 %v93
    %v1448 = vpop.f32.mrb[0].mxu0
    %v1449 = vadd.f32 %v1396, %v1448
    %v1450 = vpop.f32.mrb[0].mxu0
    %v1451 = vadd.f32 %v1398, %v1450
    %v1452 = vpop.f32.mrb[0].mxu0
    %v1453 = vadd.f32 %v1400, %v1452
    %v1454 = vpop.f32.mrb[0].mxu0
    %v1455 = vadd.f32 %v1402, %v1454
    %1456 = vmatprep.mubr.bf16.mxu0 %v101
    %1457 = vmatmul.mubr.bf16.gmra.mrb[0].mxu0 %v100
    %v1458 = vpop.f32.mrb[0].mxu0
    %v1459 = vadd.f32 %v1406, %v1458
    %v1460 = vpop.f32.mrb[0].mxu0
    %v1461 = vadd.f32 %v1408, %v1460
    %v1462 = vpop.f32.mrb[0].mxu0
    %v1463 = vadd.f32 %v1410, %v1462
    %v1464 = vpop.f32.mrb[0].mxu0
    %v1465 = vadd.f32 %v1412, %v1464
    %1466 = vdwg.mxu0
    %1467 = vmatprep.subr.bf16.mxu0 %v1102
    %1468 = vmatpush1.bf16.msra.mxu0 %v1101
    %1469 = vmatprep.subr.bf16.mxu0 0
    %1470 = vmatpush1.bf16.msra.mxu0 0
    %1471 = vmatprep.subr.bf16.mxu0 0
    %1472 = vmatpush1.bf16.msra.mxu0 0
    %1473 = vmatprep.subr.bf16.mxu0 0
    %1474 = vmatpush1.bf16.msra.mxu0 0
    %1475 = vmatprep.subr.bf16.mxu0 0
    %1476 = vmatpush1.bf16.msra.mxu0 0
    %1477 = vmatprep.subr.bf16.mxu0 0
    %1478 = vmatpush1.bf16.msra.mxu0 0
    %1479 = vmatprep.subr.bf16.mxu0 0
    %1480 = vmatpush1.bf16.msra.mxu0 0
    %1481 = vmatprep.subr.bf16.mxu0 0
    %1482 = vmatpush1.bf16.msra.mxu0 0
    %1483 = vmatprep.subr.bf16.mxu0 0
    %1484 = vmatpush1.bf16.msra.mxu0 0
    %1485 = vmatprep.subr.bf16.mxu0 0
    %1486 = vmatpush1.bf16.msra.mxu0 0
    %1487 = vmatprep.subr.bf16.mxu0 0
    %1488 = vmatpush1.bf16.msra.mxu0 0
    %1489 = vmatprep.subr.bf16.mxu0 0
    %1490 = vmatpush1.bf16.msra.mxu0 0
    %1491 = vmatprep.subr.bf16.mxu0 0
    %1492 = vmatpush1.bf16.msra.mxu0 0
    %1493 = vmatprep.subr.bf16.mxu0 0
    %1494 = vmatpush1.bf16.msra.mxu0 0
    %1495 = vmatprep.subr.bf16.mxu0 0
    %1496 = vmatpush1.bf16.msra.mxu0 0
    %1497 = vmatprep.subr.bf16.mxu0 0
    %1498 = vmatpush1.bf16.msra.mxu0 0
    %1499 = vmatprep.mubr.bf16.mxu0 0
    %1500 = vmatmul.mubr.bf16.gmra.mrb[0].mxu0 %v1303
    %v1501 = vpop.f32.mrb[0].mxu0
    %v1502 = vadd.f32 %v1449, %v1501
    %v1503 = vpop.f32.mrb[0].mxu0
    %v1504 = vadd.f32 %v1451, %v1503
    %v1505 = vpop.f32.mrb[0].mxu0
    %v1506 = vadd.f32 %v1453, %v1505
    %v1507 = vpop.f32.mrb[0].mxu0
    %v1508 = vadd.f32 %v1455, %v1507
    %1509 = vmatprep.mubr.bf16.mxu0 0
    %1510 = vmatmul.mubr.bf16.gmra.mrb[0].mxu0 %v1306
    %v1511 = vpop.f32.mrb[0].mxu0
    %v1512 = vadd.f32 %v1459, %v1511
    %v1513 = vpop.f32.mrb[0].mxu0
    %v1514 = vadd.f32 %v1461, %v1513
    %v1515 = vpop.f32.mrb[0].mxu0
    %v1516 = vadd.f32 %v1463, %v1515
    %v1517 = vpop.f32.mrb[0].mxu0
    %v1518 = vadd.f32 %v1465, %v1517
    %1519 = vdwg.mxu0
    %1520 = vmatprep.subr.bf16.mxu0 %v912
    %1521 = vmatpush1.bf16.msra.mxu0 %v911
    %1522 = vmatprep.subr.bf16.mxu0 %v916
    %1523 = vmatpush1.bf16.msra.mxu0 %v915
    %1524 = vmatprep.subr.bf16.mxu0 %v920
    %1525 = vmatpush1.bf16.msra.mxu0 %v919
    %1526 = vmatprep.subr.bf16.mxu0 %v924
    %1527 = vmatpush1.bf16.msra.mxu0 %v923
    %1528 = vmatprep.subr.bf16.mxu0 %v928
    %1529 = vmatpush1.bf16.msra.mxu0 %v927
    %1530 = vmatprep.subr.bf16.mxu0 %v932
    %1531 = vmatpush1.bf16.msra.mxu0 %v931
    %1532 = vmatprep.subr.bf16.mxu0 %v936
    %1533 = vmatpush1.bf16.msra.mxu0 %v935
    %1534 = vmatprep.subr.bf16.mxu0 %v940
    %1535 = vmatpush1.bf16.msra.mxu0 %v939
    %1536 = vmatprep.subr.bf16.mxu0 %v944
    %1537 = vmatpush1.bf16.msra.mxu0 %v943
    %1538 = vmatprep.subr.bf16.mxu0 %v948
    %1539 = vmatpush1.bf16.msra.mxu0 %v947
    %1540 = vmatprep.subr.bf16.mxu0 %v952
    %1541 = vmatpush1.bf16.msra.mxu0 %v951
    %1542 = vmatprep.subr.bf16.mxu0 %v956
    %1543 = vmatpush1.bf16.msra.mxu0 %v955
    %1544 = vmatprep.subr.bf16.mxu0 %v960
    %1545 = vmatpush1.bf16.msra.mxu0 %v959
    %1546 = vmatprep.subr.bf16.mxu0 %v964
    %1547 = vmatpush1.bf16.msra.mxu0 %v963
    %1548 = vmatprep.subr.bf16.mxu0 %v968
    %1549 = vmatpush1.bf16.msra.mxu0 %v967
    %1550 = vmatprep.subr.bf16.mxu0 %v972
    %1551 = vmatpush1.bf16.msra.mxu0 %v971
    %1552 = vmatprep.mubr.bf16.mxu0 %v90
    %1553 = vmatmul.mubr.bf16.gmra.mrb[0].mxu0 %v89
    %v1554 = vpop.f32.mrb[0].mxu0
    %v1555 = vadd.f32 %v312, %v1554
    %v1556 = vpop.f32.mrb[0].mxu0
    %v1557 = vadd.f32 %v316, %v1556
    %v1558 = vpop.f32.mrb[0].mxu0
    %v1559 = vadd.f32 %v312, %v1558
    %v1560 = vpop.f32.mrb[0].mxu0
    %v1561 = vadd.f32 %v316, %v1560
    %1562 = vmatprep.mubr.bf16.mxu0 %v97
    %1563 = vmatmul.mubr.bf16.gmra.mrb[0].mxu0 %v96
    %v1564 = vpop.f32.mrb[0].mxu0
    %v1565 = vadd.f32 %v312, %v1564
    %v1566 = vpop.f32.mrb[0].mxu0
    %v1567 = vadd.f32 %v316, %v1566
    %v1568 = vpop.f32.mrb[0].mxu0
    %v1569 = vadd.f32 %v312, %v1568
    %v1570 = vpop.f32.mrb[0].mxu0
    %v1571 = vadd.f32 %v316, %v1570
    %1572 = vdwg.mxu0
    %1573 = vmatprep.subr.bf16.mxu0 %v976
    %1574 = vmatpush1.bf16.msra.mxu0 %v975
    %1575 = vmatprep.subr.bf16.mxu0 %v980
    %1576 = vmatpush1.bf16.msra.mxu0 %v979
    %1577 = vmatprep.subr.bf16.mxu0 %v984
    %1578 = vmatpush1.bf16.msra.mxu0 %v983
    %1579 = vmatprep.subr.bf16.mxu0 %v988
    %1580 = vmatpush1.bf16.msra.mxu0 %v987
    %1581 = vmatprep.subr.bf16.mxu0 %v992
    %1582 = vmatpush1.bf16.msra.mxu0 %v991
    %1583 = vmatprep.subr.bf16.mxu0 %v996
    %1584 = vmatpush1.bf16.msra.mxu0 %v995
    %1585 = vmatprep.subr.bf16.mxu0 %v1000
    %1586 = vmatpush1.bf16.msra.mxu0 %v999
    %1587 = vmatprep.subr.bf16.mxu0 %v1004
    %1588 = vmatpush1.bf16.msra.mxu0 %v1003
    %1589 = vmatprep.subr.bf16.mxu0 %v1008
    %1590 = vmatpush1.bf16.msra.mxu0 %v1007
    %1591 = vmatprep.subr.bf16.mxu0 %v1012
    %1592 = vmatpush1.bf16.msra.mxu0 %v1011
    %1593 = vmatprep.subr.bf16.mxu0 %v1016
    %1594 = vmatpush1.bf16.msra.mxu0 %v1015
    %1595 = vmatprep.subr.bf16.mxu0 %v1020
    %1596 = vmatpush1.bf16.msra.mxu0 %v1019
    %1597 = vmatprep.subr.bf16.mxu0 %v1024
    %1598 = vmatpush1.bf16.msra.mxu0 %v1023
    %1599 = vmatprep.subr.bf16.mxu0 %v1028
    %1600 = vmatpush1.bf16.msra.mxu0 %v1027
    %1601 = vmatprep.subr.bf16.mxu0 %v1032
    %1602 = vmatpush1.bf16.msra.mxu0 %v1031
    %1603 = vmatprep.subr.bf16.mxu0 %v1036
    %1604 = vmatpush1.bf16.msra.mxu0 %v1035
    %1605 = vmatprep.mubr.bf16.mxu0 %v92
    %1606 = vmatmul.mubr.bf16.gmra.mrb[0].mxu0 %v91
    %v1607 = vpop.f32.mrb[0].mxu0
    %v1608 = vadd.f32 %v1555, %v1607
    %v1609 = vpop.f32.mrb[0].mxu0
    %v1610 = vadd.f32 %v1557, %v1609
    %v1611 = vpop.f32.mrb[0].mxu0
    %v1612 = vadd.f32 %v1559, %v1611
    %v1613 = vpop.f32.mrb[0].mxu0
    %v1614 = vadd.f32 %v1561, %v1613
    %1615 = vmatprep.mubr.bf16.mxu0 %v99
    %1616 = vmatmul.mubr.bf16.gmra.mrb[0].mxu0 %v98
    %v1617 = vpop.f32.mrb[0].mxu0
    %v1618 = vadd.f32 %v1565, %v1617
    %v1619 = vpop.f32.mrb[0].mxu0
    %v1620 = vadd.f32 %v1567, %v1619
    %v1621 = vpop.f32.mrb[0].mxu0
    %v1622 = vadd.f32 %v1569, %v1621
    %v1623 = vpop.f32.mrb[0].mxu0
    %v1624 = vadd.f32 %v1571, %v1623
    %1625 = vdwg.mxu0
    %1626 = vmatprep.subr.bf16.mxu0 %v1040
    %1627 = vmatpush1.bf16.msra.mxu0 %v1039
    %1628 = vmatprep.subr.bf16.mxu0 %v1044
    %1629 = vmatpush1.bf16.msra.mxu0 %v1043
    %1630 = vmatprep.subr.bf16.mxu0 %v1048
    %1631 = vmatpush1.bf16.msra.mxu0 %v1047
    %1632 = vmatprep.subr.bf16.mxu0 %v1052
    %1633 = vmatpush1.bf16.msra.mxu0 %v1051
    %1634 = vmatprep.subr.bf16.mxu0 %v1056
    %1635 = vmatpush1.bf16.msra.mxu0 %v1055
    %1636 = vmatprep.subr.bf16.mxu0 %v1060
    %1637 = vmatpush1.bf16.msra.mxu0 %v1059
    %1638 = vmatprep.subr.bf16.mxu0 %v1064
    %1639 = vmatpush1.bf16.msra.mxu0 %v1063
    %1640 = vmatprep.subr.bf16.mxu0 %v1068
    %1641 = vmatpush1.bf16.msra.mxu0 %v1067
    %1642 = vmatprep.subr.bf16.mxu0 %v1072
    %1643 = vmatpush1.bf16.msra.mxu0 %v1071
    %1644 = vmatprep.subr.bf16.mxu0 %v1076
    %1645 = vmatpush1.bf16.msra.mxu0 %v1075
    %1646 = vmatprep.subr.bf16.mxu0 %v1080
    %1647 = vmatpush1.bf16.msra.mxu0 %v1079
    %1648 = vmatprep.subr.bf16.mxu0 %v1084
    %1649 = vmatpush1.bf16.msra.mxu0 %v1083
    %1650 = vmatprep.subr.bf16.mxu0 %v1088
    %1651 = vmatpush1.bf16.msra.mxu0 %v1087
    %1652 = vmatprep.subr.bf16.mxu0 %v1092
    %1653 = vmatpush1.bf16.msra.mxu0 %v1091
    %1654 = vmatprep.subr.bf16.mxu0 %v1096
    %1655 = vmatpush1.bf16.msra.mxu0 %v1095
    %1656 = vmatprep.subr.bf16.mxu0 %v1100
    %1657 = vmatpush1.bf16.msra.mxu0 %v1099
    %1658 = vmatprep.mubr.bf16.mxu0 %v94
    %1659 = vmatmul.mubr.bf16.gmra.mrb[0].mxu0 %v93
    %v1660 = vpop.f32.mrb[0].mxu0
    %v1661 = vadd.f32 %v1608, %v1660
    %v1662 = vpop.f32.mrb[0].mxu0
    %v1663 = vadd.f32 %v1610, %v1662
    %v1664 = vpop.f32.mrb[0].mxu0
    %v1665 = vadd.f32 %v1612, %v1664
    %v1666 = vpop.f32.mrb[0].mxu0
    %v1667 = vadd.f32 %v1614, %v1666
    %1668 = vmatprep.mubr.bf16.mxu0 %v101
    %1669 = vmatmul.mubr.bf16.gmra.mrb[0].mxu0 %v100
    %v1670 = vpop.f32.mrb[0].mxu0
    %v1671 = vadd.f32 %v1618, %v1670
    %v1672 = vpop.f32.mrb[0].mxu0
    %v1673 = vadd.f32 %v1620, %v1672
    %v1674 = vpop.f32.mrb[0].mxu0
    %v1675 = vadd.f32 %v1622, %v1674
    %v1676 = vpop.f32.mrb[0].mxu0
    %v1677 = vadd.f32 %v1624, %v1676
    %1678 = vdwg.mxu0
    %1679 = vmatprep.subr.bf16.mxu0 %v1104
    %1680 = vmatpush1.bf16.msra.mxu0 %v1103
    %1681 = vmatprep.subr.bf16.mxu0 0
    %1682 = vmatpush1.bf16.msra.mxu0 0
    %1683 = vmatprep.subr.bf16.mxu0 0
    %1684 = vmatpush1.bf16.msra.mxu0 0
    %1685 = vmatprep.subr.bf16.mxu0 0
    %1686 = vmatpush1.bf16.msra.mxu0 0
    %1687 = vmatprep.subr.bf16.mxu0 0
    %1688 = vmatpush1.bf16.msra.mxu0 0
    %1689 = vmatprep.subr.bf16.mxu0 0
    %1690 = vmatpush1.bf16.msra.mxu0 0
    %1691 = vmatprep.subr.bf16.mxu0 0
    %1692 = vmatpush1.bf16.msra.mxu0 0
    %1693 = vmatprep.subr.bf16.mxu0 0
    %1694 = vmatpush1.bf16.msra.mxu0 0
    %1695 = vmatprep.subr.bf16.mxu0 0
    %1696 = vmatpush1.bf16.msra.mxu0 0
    %1697 = vmatprep.subr.bf16.mxu0 0
    %1698 = vmatpush1.bf16.msra.mxu0 0
    %1699 = vmatprep.subr.bf16.mxu0 0
    %1700 = vmatpush1.bf16.msra.mxu0 0
    %1701 = vmatprep.subr.bf16.mxu0 0
    %1702 = vmatpush1.bf16.msra.mxu0 0
    %1703 = vmatprep.subr.bf16.mxu0 0
    %1704 = vmatpush1.bf16.msra.mxu0 0
    %1705 = vmatprep.subr.bf16.mxu0 0
    %1706 = vmatpush1.bf16.msra.mxu0 0
    %1707 = vmatprep.subr.bf16.mxu0 0
    %1708 = vmatpush1.bf16.msra.mxu0 0
    %1709 = vmatprep.subr.bf16.mxu0 0
    %1710 = vmatpush1.bf16.msra.mxu0 0
    %1711 = vmatprep.mubr.bf16.mxu0 0
    %1712 = vmatmul.mubr.bf16.gmra.mrb[0].mxu0 %v1303
    %v1713 = vpop.f32.mrb[0].mxu0
    %v1714 = vadd.f32 %v1661, %v1713
    %v1715 = vpop.f32.mrb[0].mxu0
    %v1716 = vadd.f32 %v1663, %v1715
    %v1717 = vpop.f32.mrb[0].mxu0
    %v1718 = vadd.f32 %v1665, %v1717
    %v1719 = vpop.f32.mrb[0].mxu0
    %v1720 = vadd.f32 %v1667, %v1719
    %1721 = vmatprep.mubr.bf16.mxu0 0
    %1722 = vmatmul.mubr.bf16.gmra.mrb[0].mxu0 %v1306
    %v1723 = vpop.f32.mrb[0].mxu0
    %v1724 = vadd.f32 %v1671, %v1723
    %v1725 = vpop.f32.mrb[0].mxu0
    %v1726 = vadd.f32 %v1673, %v1725
    %v1727 = vpop.f32.mrb[0].mxu0
    %v1728 = vadd.f32 %v1675, %v1727
    %v1729 = vpop.f32.mrb[0].mxu0
    %v1730 = vadd.f32 %v1677, %v1729
    %1731 = vdwg.mxu0
    %v1732 = vmax.f32 %v1502, 0.0
    %v1733 = vmax.f32 %v1504, 0.0
    %v1734 = vmax.f32 %v1714, 0.0
    %v1735 = vmax.f32 %v1716, 0.0
    %v1736 = vmax.f32 %v1506, 0.0
    %v1737 = vmax.f32 %v1508, 0.0
    %v1738 = vmax.f32 %v1718, 0.0
    %v1739 = vmax.f32 %v1720, 0.0
    %v1740 = vmax.f32 %v1512, 0.0
    %v1741 = vmax.f32 %v1514, 0.0
    %v1742 = vmax.f32 %v1724, 0.0
    %v1743 = vmax.f32 %v1726, 0.0
    %v1744 = vmax.f32 %v1516, 0.0
    %v1745 = vmax.f32 %v1518, 0.0
    %v1746 = vmax.f32 %v1728, 0.0
    %v1747 = vmax.f32 %v1730, 0.0
    %v1748 = vpack.c.bf16 %v1736, %v1732
    %v1749 = vpack.c.bf16 %v1737, %v1733
    %v1750 = vpack.c.bf16 %v1738, %v1734
    %v1751 = vpack.c.bf16 %v1739, %v1735
    %v1752 = vpack.c.bf16 %v1744, %v1740
    %v1753 = vpack.c.bf16 %v1745, %v1741
    %v1754 = vpack.c.bf16 %v1746, %v1742
    %v1755 = vpack.c.bf16 %v1747, %v1743
    %v1756 = vld [vmem:[#allocation4] sm:$0xff]
    %v1757 = vld [vmem:[#allocation4 + $0x8] sm:$0xff]
    %v1758 = vld [vmem:[#allocation4 + $0x10] sm:$0xff]
    %v1759 = vld [vmem:[#allocation4 + $0x18] sm:$0xff]
    %v1760 = vld [vmem:[#allocation4 + $0x20] sm:$0xff]
    %v1761 = vld [vmem:[#allocation4 + $0x28] sm:$0xff]
    %v1762 = vld [vmem:[#allocation4 + $0x30] sm:$0xff]
    %v1763 = vld [vmem:[#allocation4 + $0x38] sm:$0xff]
    %v1764 = vld [vmem:[#allocation4 + $0x40] sm:$0xff]
    %v1765 = vld [vmem:[#allocation4 + $0x48] sm:$0xff]
    %v1766 = vld [vmem:[#allocation4 + $0x50] sm:$0xff]
    %v1767 = vld [vmem:[#allocation4 + $0x58] sm:$0xff]
    %v1768 = vld [vmem:[#allocation4 + $0x60] sm:$0xff]
    %v1769 = vld [vmem:[#allocation4 + $0x68] sm:$0xff]
    %v1770 = vld [vmem:[#allocation4 + $0x70] sm:$0xff]
    %v1771 = vld [vmem:[#allocation4 + $0x78] sm:$0xff]
    %v1772 = vld [vmem:[#allocation4 + $0x80] sm:$0xff]
    %v1773 = vld [vmem:[#allocation4 + $0x88] sm:$0xff]
    %v1774 = vld [vmem:[#allocation4 + $0x90] sm:$0xff]
    %v1775 = vld [vmem:[#allocation4 + $0x98] sm:$0xff]
    %v1776 = vld [vmem:[#allocation4 + $0xa0] sm:$0xff]
    %v1777 = vld [vmem:[#allocation4 + $0xa8] sm:$0xff]
    %v1778 = vld [vmem:[#allocation4 + $0xb0] sm:$0xff]
    %v1779 = vld [vmem:[#allocation4 + $0xb8] sm:$0xff]
    %v1780 = vld [vmem:[#allocation4 + $0xc0] sm:$0xff]
    %v1781 = vld [vmem:[#allocation4 + $0xc8] sm:$0xff]
    %v1782 = vld [vmem:[#allocation4 + $0xd0] sm:$0xff]
    %v1783 = vld [vmem:[#allocation4 + $0xd8] sm:$0xff]
    %v1784 = vld [vmem:[#allocation4 + $0xe0] sm:$0xff]
    %v1785 = vld [vmem:[#allocation4 + $0xe8] sm:$0xff]
    %v1786 = vld [vmem:[#allocation4 + $0xf0] sm:$0xff]
    %v1787 = vld [vmem:[#allocation4 + $0xf8] sm:$0xff]
    %v1788 = vld [vmem:[#allocation4 + $0x100] sm:$0xff]
    %v1789 = vld [vmem:[#allocation4 + $0x108] sm:$0xff]
    %v1790 = vld [vmem:[#allocation4 + $0x110] sm:$0xff]
    %v1791 = vld [vmem:[#allocation4 + $0x118] sm:$0xff]
    %v1792 = vld [vmem:[#allocation4 + $0x120] sm:$0xff]
    %v1793 = vld [vmem:[#allocation4 + $0x128] sm:$0xff]
    %v1794 = vld [vmem:[#allocation4 + $0x130] sm:$0xff]
    %v1795 = vld [vmem:[#allocation4 + $0x138] sm:$0xff]
    %v1796 = vld [vmem:[#allocation4 + $0x140] sm:$0xff]
    %v1797 = vld [vmem:[#allocation4 + $0x148] sm:$0xff]
    %v1798 = vld [vmem:[#allocation4 + $0x150] sm:$0xff]
    %v1799 = vld [vmem:[#allocation4 + $0x158] sm:$0xff]
    %v1800 = vld [vmem:[#allocation4 + $0x160] sm:$0xff]
    %v1801 = vld [vmem:[#allocation4 + $0x168] sm:$0xff]
    %v1802 = vld [vmem:[#allocation4 + $0x170] sm:$0xff]
    %v1803 = vld [vmem:[#allocation4 + $0x178] sm:$0xff]
    %v1804 = vld [vmem:[#allocation4 + $0x180] sm:$0xff]
    %v1805 = vld [vmem:[#allocation4 + $0x188] sm:$0xff]
    %v1806 = vld [vmem:[#allocation4 + $0x190] sm:$0xff]
    %v1807 = vld [vmem:[#allocation4 + $0x198] sm:$0xff]
    %v1808 = vld [vmem:[#allocation4 + $0x1a0] sm:$0xff]
    %v1809 = vld [vmem:[#allocation4 + $0x1a8] sm:$0xff]
    %v1810 = vld [vmem:[#allocation4 + $0x1b0] sm:$0xff]
    %v1811 = vld [vmem:[#allocation4 + $0x1b8] sm:$0xff]
    %v1812 = vld [vmem:[#allocation4 + $0x1c0] sm:$0xff]
    %v1813 = vld [vmem:[#allocation4 + $0x1c8] sm:$0xff]
    %v1814 = vld [vmem:[#allocation4 + $0x1d0] sm:$0xff]
    %v1815 = vld [vmem:[#allocation4 + $0x1d8] sm:$0xff]
    %v1816 = vld [vmem:[#allocation4 + $0x1e0] sm:$0xff]
    %v1817 = vld [vmem:[#allocation4 + $0x1e8] sm:$0xff]
    %v1818 = vld [vmem:[#allocation4 + $0x1f0] sm:$0xff]
    %v1819 = vld [vmem:[#allocation4 + $0x1f8] sm:$0xff]
    %v1820 = vld [vmem:[%s4] sm:$0x3]
    %v1822 = vlaneseq
    %v1823 = vshrl.u32 %v1822, 7
    %v1824 = vsub.s32 0, %v1823
    %v1825 = vrot.slane %v1820, %v1824
    %v1826 = vlaneseq
    %v1827 = vshrl.u32 %v1826, 7
    %v1828 = vsub.s32 1, %v1827
    %v1829 = vrot.slane %v1820, %v1828
    %v1896 = vunpack.c.l.b16 %v1756
    %v1897 = vunpack.c.h.b16 %v1756
    %v1898 = vunpack.c.l.b16 %v1757
    %v1899 = vunpack.c.h.b16 %v1757
    %v1900 = vunpack.c.l.b16 %v1758
    %v1901 = vunpack.c.h.b16 %v1758
    %v1902 = vunpack.c.l.b16 %v1759
    %v1903 = vunpack.c.h.b16 %v1759
    %v1904 = vunpack.c.l.b16 %v1760
    %v1905 = vunpack.c.h.b16 %v1760
    %v1906 = vunpack.c.l.b16 %v1761
    %v1907 = vunpack.c.h.b16 %v1761
    %v1908 = vunpack.c.l.b16 %v1762
    %v1909 = vunpack.c.h.b16 %v1762
    %v1910 = vunpack.c.l.b16 %v1763
    %v1911 = vunpack.c.h.b16 %v1763
    %v1912 = vunpack.c.l.b16 %v1764
    %v1913 = vunpack.c.h.b16 %v1764
    %v1914 = vunpack.c.l.b16 %v1765
    %v1915 = vunpack.c.h.b16 %v1765
    %v1916 = vunpack.c.l.b16 %v1766
    %v1917 = vunpack.c.h.b16 %v1766
    %v1918 = vunpack.c.l.b16 %v1767
    %v1919 = vunpack.c.h.b16 %v1767
    %v1920 = vunpack.c.l.b16 %v1768
    %v1921 = vunpack.c.h.b16 %v1768
    %v1922 = vunpack.c.l.b16 %v1769
    %v1923 = vunpack.c.h.b16 %v1769
    %v1924 = vunpack.c.l.b16 %v1770
    %v1925 = vunpack.c.h.b16 %v1770
    %v1926 = vunpack.c.l.b16 %v1771
    %v1927 = vunpack.c.h.b16 %v1771
    %v1928 = vunpack.c.l.b16 %v1772
    %v1929 = vunpack.c.h.b16 %v1772
    %v1930 = vunpack.c.l.b16 %v1773
    %v1931 = vunpack.c.h.b16 %v1773
    %v1932 = vunpack.c.l.b16 %v1774
    %v1933 = vunpack.c.h.b16 %v1774
    %v1934 = vunpack.c.l.b16 %v1775
    %v1935 = vunpack.c.h.b16 %v1775
    %v1936 = vunpack.c.l.b16 %v1776
    %v1937 = vunpack.c.h.b16 %v1776
    %v1938 = vunpack.c.l.b16 %v1777
    %v1939 = vunpack.c.h.b16 %v1777
    %v1940 = vunpack.c.l.b16 %v1778
    %v1941 = vunpack.c.h.b16 %v1778
    %v1942 = vunpack.c.l.b16 %v1779
    %v1943 = vunpack.c.h.b16 %v1779
    %v1944 = vunpack.c.l.b16 %v1780
    %v1945 = vunpack.c.h.b16 %v1780
    %v1946 = vunpack.c.l.b16 %v1781
    %v1947 = vunpack.c.h.b16 %v1781
    %v1948 = vunpack.c.l.b16 %v1782
    %v1949 = vunpack.c.h.b16 %v1782
    %v1950 = vunpack.c.l.b16 %v1783
    %v1951 = vunpack.c.h.b16 %v1783
    %v1952 = vunpack.c.l.b16 %v1784
    %v1953 = vunpack.c.h.b16 %v1784
    %v1954 = vunpack.c.l.b16 %v1785
    %v1955 = vunpack.c.h.b16 %v1785
    %v1956 = vunpack.c.l.b16 %v1786
    %v1957 = vunpack.c.h.b16 %v1786
    %v1958 = vunpack.c.l.b16 %v1787
    %v1959 = vunpack.c.h.b16 %v1787
    %v1960 = vunpack.c.l.b16 %v1788
    %v1961 = vunpack.c.h.b16 %v1788
    %v1962 = vunpack.c.l.b16 %v1789
    %v1963 = vunpack.c.h.b16 %v1789
    %v1964 = vunpack.c.l.b16 %v1790
    %v1965 = vunpack.c.h.b16 %v1790
    %v1966 = vunpack.c.l.b16 %v1791
    %v1967 = vunpack.c.h.b16 %v1791
    %v1968 = vunpack.c.l.b16 %v1792
    %v1969 = vunpack.c.h.b16 %v1792
    %v1970 = vunpack.c.l.b16 %v1793
    %v1971 = vunpack.c.h.b16 %v1793
    %v1972 = vunpack.c.l.b16 %v1794
    %v1973 = vunpack.c.h.b16 %v1794
    %v1974 = vunpack.c.l.b16 %v1795
    %v1975 = vunpack.c.h.b16 %v1795
    %v1976 = vunpack.c.l.b16 %v1796
    %v1977 = vunpack.c.h.b16 %v1796
    %v1978 = vunpack.c.l.b16 %v1797
    %v1979 = vunpack.c.h.b16 %v1797
    %v1980 = vunpack.c.l.b16 %v1798
    %v1981 = vunpack.c.h.b16 %v1798
    %v1982 = vunpack.c.l.b16 %v1799
    %v1983 = vunpack.c.h.b16 %v1799
    %v1984 = vunpack.c.l.b16 %v1800
    %v1985 = vunpack.c.h.b16 %v1800
    %v1986 = vunpack.c.l.b16 %v1801
    %v1987 = vunpack.c.h.b16 %v1801
    %v1988 = vunpack.c.l.b16 %v1802
    %v1989 = vunpack.c.h.b16 %v1802
    %v1990 = vunpack.c.l.b16 %v1803
    %v1991 = vunpack.c.h.b16 %v1803
    %v1992 = vunpack.c.l.b16 %v1804
    %v1993 = vunpack.c.h.b16 %v1804
    %v1994 = vunpack.c.l.b16 %v1805
    %v1995 = vunpack.c.h.b16 %v1805
    %v1996 = vunpack.c.l.b16 %v1806
    %v1997 = vunpack.c.h.b16 %v1806
    %v1998 = vunpack.c.l.b16 %v1807
    %v1999 = vunpack.c.h.b16 %v1807
    %v2000 = vunpack.c.l.b16 %v1808
    %v2001 = vunpack.c.h.b16 %v1808
    %v2002 = vunpack.c.l.b16 %v1809
    %v2003 = vunpack.c.h.b16 %v1809
    %v2004 = vunpack.c.l.b16 %v1810
    %v2005 = vunpack.c.h.b16 %v1810
    %v2006 = vunpack.c.l.b16 %v1811
    %v2007 = vunpack.c.h.b16 %v1811
    %v2008 = vunpack.c.l.b16 %v1812
    %v2009 = vunpack.c.h.b16 %v1812
    %v2010 = vunpack.c.l.b16 %v1813
    %v2011 = vunpack.c.h.b16 %v1813
    %v2012 = vunpack.c.l.b16 %v1814
    %v2013 = vunpack.c.h.b16 %v1814
    %v2014 = vunpack.c.l.b16 %v1815
    %v2015 = vunpack.c.h.b16 %v1815
    %v2016 = vunpack.c.l.b16 %v1816
    %v2017 = vunpack.c.h.b16 %v1816
    %v2018 = vunpack.c.l.b16 %v1817
    %v2019 = vunpack.c.h.b16 %v1817
    %v2020 = vunpack.c.l.b16 %v1818
    %v2021 = vunpack.c.h.b16 %v1818
    %v2022 = vunpack.c.l.b16 %v1819
    %v2023 = vunpack.c.h.b16 %v1819
    %v2024 = vpack.c.b16 %v1898, %v1896
    %v2025 = vpack.c.b16 %v1899, %v1897
    %v2026 = vpack.c.b16 %v1902, %v1900
    %v2027 = vpack.c.b16 %v1903, %v1901
    %v2028 = vpack.c.b16 %v1906, %v1904
    %v2029 = vpack.c.b16 %v1907, %v1905
    %v2030 = vpack.c.b16 %v1910, %v1908
    %v2031 = vpack.c.b16 %v1911, %v1909
    %v2032 = vpack.c.b16 %v1914, %v1912
    %v2033 = vpack.c.b16 %v1915, %v1913
    %v2034 = vpack.c.b16 %v1918, %v1916
    %v2035 = vpack.c.b16 %v1919, %v1917
    %v2036 = vpack.c.b16 %v1922, %v1920
    %v2037 = vpack.c.b16 %v1923, %v1921
    %v2038 = vpack.c.b16 %v1926, %v1924
    %v2039 = vpack.c.b16 %v1927, %v1925
    %v2040 = vpack.c.b16 %v1930, %v1928
    %v2041 = vpack.c.b16 %v1931, %v1929
    %v2042 = vpack.c.b16 %v1934, %v1932
    %v2043 = vpack.c.b16 %v1935, %v1933
    %v2044 = vpack.c.b16 %v1938, %v1936
    %v2045 = vpack.c.b16 %v1939, %v1937
    %v2046 = vpack.c.b16 %v1942, %v1940
    %v2047 = vpack.c.b16 %v1943, %v1941
    %v2048 = vpack.c.b16 %v1946, %v1944
    %v2049 = vpack.c.b16 %v1947, %v1945
    %v2050 = vpack.c.b16 %v1950, %v1948
    %v2051 = vpack.c.b16 %v1951, %v1949
    %v2052 = vpack.c.b16 %v1954, %v1952
    %v2053 = vpack.c.b16 %v1955, %v1953
    %v2054 = vpack.c.b16 %v1958, %v1956
    %v2055 = vpack.c.b16 %v1959, %v1957
    %v2056 = vpack.c.b16 %v1962, %v1960
    %v2057 = vpack.c.b16 %v1963, %v1961
    %v2058 = vpack.c.b16 %v1966, %v1964
    %v2059 = vpack.c.b16 %v1967, %v1965
    %v2060 = vpack.c.b16 %v1970, %v1968
    %v2061 = vpack.c.b16 %v1971, %v1969
    %v2062 = vpack.c.b16 %v1974, %v1972
    %v2063 = vpack.c.b16 %v1975, %v1973
    %v2064 = vpack.c.b16 %v1978, %v1976
    %v2065 = vpack.c.b16 %v1979, %v1977
    %v2066 = vpack.c.b16 %v1982, %v1980
    %v2067 = vpack.c.b16 %v1983, %v1981
    %v2068 = vpack.c.b16 %v1986, %v1984
    %v2069 = vpack.c.b16 %v1987, %v1985
    %v2070 = vpack.c.b16 %v1990, %v1988
    %v2071 = vpack.c.b16 %v1991, %v1989
    %v2072 = vpack.c.b16 %v1994, %v1992
    %v2073 = vpack.c.b16 %v1995, %v1993
    %v2074 = vpack.c.b16 %v1998, %v1996
    %v2075 = vpack.c.b16 %v1999, %v1997
    %v2076 = vpack.c.b16 %v2002, %v2000
    %v2077 = vpack.c.b16 %v2003, %v2001
    %v2078 = vpack.c.b16 %v2006, %v2004
    %v2079 = vpack.c.b16 %v2007, %v2005
    %v2080 = vpack.c.b16 %v2010, %v2008
    %v2081 = vpack.c.b16 %v2011, %v2009
    %v2082 = vpack.c.b16 %v2014, %v2012
    %v2083 = vpack.c.b16 %v2015, %v2013
    %v2084 = vpack.c.b16 %v2018, %v2016
    %v2085 = vpack.c.b16 %v2019, %v2017
    %v2086 = vpack.c.b16 %v2022, %v2020
    %v2087 = vpack.c.b16 %v2023, %v2021
    %2152 = vmatprep.subr.bf16.mxu0 %v2025
    %2153 = vmatpush1.bf16.msra.mxu0 %v2024
    %2154 = vmatprep.subr.bf16.mxu0 %v2027
    %2155 = vmatpush1.bf16.msra.mxu0 %v2026
    %2156 = vmatprep.subr.bf16.mxu0 %v2029
    %2157 = vmatpush1.bf16.msra.mxu0 %v2028
    %2158 = vmatprep.subr.bf16.mxu0 %v2031
    %2159 = vmatpush1.bf16.msra.mxu0 %v2030
    %2160 = vmatprep.subr.bf16.mxu0 %v2033
    %2161 = vmatpush1.bf16.msra.mxu0 %v2032
    %2162 = vmatprep.subr.bf16.mxu0 %v2035
    %2163 = vmatpush1.bf16.msra.mxu0 %v2034
    %2164 = vmatprep.subr.bf16.mxu0 %v2037
    %2165 = vmatpush1.bf16.msra.mxu0 %v2036
    %2166 = vmatprep.subr.bf16.mxu0 %v2039
    %2167 = vmatpush1.bf16.msra.mxu0 %v2038
    %2168 = vmatprep.subr.bf16.mxu0 %v2041
    %2169 = vmatpush1.bf16.msra.mxu0 %v2040
    %2170 = vmatprep.subr.bf16.mxu0 %v2043
    %2171 = vmatpush1.bf16.msra.mxu0 %v2042
    %2172 = vmatprep.subr.bf16.mxu0 %v2045
    %2173 = vmatpush1.bf16.msra.mxu0 %v2044
    %2174 = vmatprep.subr.bf16.mxu0 %v2047
    %2175 = vmatpush1.bf16.msra.mxu0 %v2046
    %2176 = vmatprep.subr.bf16.mxu0 %v2049
    %2177 = vmatpush1.bf16.msra.mxu0 %v2048
    %2178 = vmatprep.subr.bf16.mxu0 %v2051
    %2179 = vmatpush1.bf16.msra.mxu0 %v2050
    %2180 = vmatprep.subr.bf16.mxu0 %v2053
    %2181 = vmatpush1.bf16.msra.mxu0 %v2052
    %2182 = vmatprep.subr.bf16.mxu0 %v2055
    %2183 = vmatpush1.bf16.msra.mxu0 %v2054
    %2184 = vmatprep.mubr.bf16.mxu0 %v1749
    %2185 = vmatmul.mubr.bf16.gmra.mrb[0].mxu0 %v1748
    %v2186 = vpop.f32.mrb[0].mxu0
    %v2187 = vadd.f32 %v1825, %v2186
    %v2188 = vpop.f32.mrb[0].mxu0
    %v2189 = vadd.f32 %v1829, %v2188
    %v2190 = vpop.f32.mrb[0].mxu0
    %v2191 = vadd.f32 %v1825, %v2190
    %v2192 = vpop.f32.mrb[0].mxu0
    %v2193 = vadd.f32 %v1829, %v2192
    %2194 = vmatprep.mubr.bf16.mxu0 %v1753
    %2195 = vmatmul.mubr.bf16.gmra.mrb[0].mxu0 %v1752
    %v2196 = vpop.f32.mrb[0].mxu0
    %v2197 = vadd.f32 %v1825, %v2196
    %v2198 = vpop.f32.mrb[0].mxu0
    %v2199 = vadd.f32 %v1829, %v2198
    %v2200 = vpop.f32.mrb[0].mxu0
    %v2201 = vadd.f32 %v1825, %v2200
    %v2202 = vpop.f32.mrb[0].mxu0
    %v2203 = vadd.f32 %v1829, %v2202
    %2204 = vdwg.mxu0
    %2205 = vmatprep.subr.bf16.mxu0 %v2057
    %2206 = vmatpush1.bf16.msra.mxu0 %v2056
    %2207 = vmatprep.subr.bf16.mxu0 %v2059
    %2208 = vmatpush1.bf16.msra.mxu0 %v2058
    %2209 = vmatprep.subr.bf16.mxu0 %v2061
    %2210 = vmatpush1.bf16.msra.mxu0 %v2060
    %2211 = vmatprep.subr.bf16.mxu0 %v2063
    %2212 = vmatpush1.bf16.msra.mxu0 %v2062
    %2213 = vmatprep.subr.bf16.mxu0 %v2065
    %2214 = vmatpush1.bf16.msra.mxu0 %v2064
    %2215 = vmatprep.subr.bf16.mxu0 %v2067
    %2216 = vmatpush1.bf16.msra.mxu0 %v2066
    %2217 = vmatprep.subr.bf16.mxu0 %v2069
    %2218 = vmatpush1.bf16.msra.mxu0 %v2068
    %2219 = vmatprep.subr.bf16.mxu0 %v2071
    %2220 = vmatpush1.bf16.msra.mxu0 %v2070
    %2221 = vmatprep.subr.bf16.mxu0 %v2073
    %2222 = vmatpush1.bf16.msra.mxu0 %v2072
    %2223 = vmatprep.subr.bf16.mxu0 %v2075
    %2224 = vmatpush1.bf16.msra.mxu0 %v2074
    %2225 = vmatprep.subr.bf16.mxu0 %v2077
    %2226 = vmatpush1.bf16.msra.mxu0 %v2076
    %2227 = vmatprep.subr.bf16.mxu0 %v2079
    %2228 = vmatpush1.bf16.msra.mxu0 %v2078
    %2229 = vmatprep.subr.bf16.mxu0 %v2081
    %2230 = vmatpush1.bf16.msra.mxu0 %v2080
    %2231 = vmatprep.subr.bf16.mxu0 %v2083
    %2232 = vmatpush1.bf16.msra.mxu0 %v2082
    %2233 = vmatprep.subr.bf16.mxu0 %v2085
    %2234 = vmatpush1.bf16.msra.mxu0 %v2084
    %2235 = vmatprep.subr.bf16.mxu0 %v2087
    %2236 = vmatpush1.bf16.msra.mxu0 %v2086
    %2237 = vmatprep.mubr.bf16.mxu0 %v1751
    %2238 = vmatmul.mubr.bf16.gmra.mrb[0].mxu0 %v1750
    %v2239 = vpop.f32.mrb[0].mxu0
    %v2240 = vadd.f32 %v2187, %v2239
    %v2241 = vpop.f32.mrb[0].mxu0
    %v2242 = vadd.f32 %v2189, %v2241
    %v2243 = vpop.f32.mrb[0].mxu0
    %v2244 = vadd.f32 %v2191, %v2243
    %v2245 = vpop.f32.mrb[0].mxu0
    %v2246 = vadd.f32 %v2193, %v2245
    %2247 = vmatprep.mubr.bf16.mxu0 %v1755
    %2248 = vmatmul.mubr.bf16.gmra.mrb[0].mxu0 %v1754
    %v2249 = vpop.f32.mrb[0].mxu0
    %v2250 = vadd.f32 %v2197, %v2249
    %v2251 = vpop.f32.mrb[0].mxu0
    %v2252 = vadd.f32 %v2199, %v2251
    %v2253 = vpop.f32.mrb[0].mxu0
    %v2254 = vadd.f32 %v2201, %v2253
    %v2255 = vpop.f32.mrb[0].mxu0
    %v2256 = vadd.f32 %v2203, %v2255
    %2257 = vdwg.mxu0
    %v2258 = vmax.f32 %v2240, 0.0
    %v2259 = vmax.f32 %v2242, 0.0
    %v2260 = vmax.f32 %v2244, 0.0
    %v2261 = vmax.f32 %v2246, 0.0
    %v2262 = vmax.f32 %v2250, 0.0
    %v2263 = vmax.f32 %v2252, 0.0
    %v2264 = vmax.f32 %v2254, 0.0
    %v2265 = vmax.f32 %v2256, 0.0
    %v2266 = vpack.c.bf16 %v2260, %v2258
    %v2267 = vpack.c.bf16 %v2261, %v2259
    %v2268 = vpack.c.bf16 %v2264, %v2262
    %v2269 = vpack.c.bf16 %v2265, %v2263
    %v2270 = vld [vmem:[%s5] sm:$0xf]
    %v2271 = vld [vmem:[%s5 + $0x4] sm:$0xf]
    %v2272 = vld [vmem:[%s5 + $0x8] sm:$0xf]
    %v2273 = vld [vmem:[%s5 + $0xc] sm:$0xf]
    %v2274 = vld [vmem:[%s5 + $0x10] sm:$0xf]
    %v2275 = vld [vmem:[%s5 + $0x14] sm:$0xf]
    %v2276 = vld [vmem:[%s5 + $0x18] sm:$0xf]
    %v2277 = vld [vmem:[%s5 + $0x1c] sm:$0xf]
    %v2278 = vld [vmem:[%s5 + $0x20] sm:$0xf]
    %v2279 = vld [vmem:[%s5 + $0x24] sm:$0xf]
    %v2280 = vld [vmem:[%s5 + $0x28] sm:$0xf]
    %v2281 = vld [vmem:[%s5 + $0x2c] sm:$0xf]
    %v2282 = vld [vmem:[%s5 + $0x30] sm:$0xf]
    %v2283 = vld [vmem:[%s5 + $0x34] sm:$0xf]
    %v2284 = vld [vmem:[%s5 + $0x38] sm:$0xf]
    %v2285 = vld [vmem:[%s5 + $0x3c] sm:$0xf]
    %v2286 = vld [vmem:[%s5 + $0x40] sm:$0xf]
    %v2287 = vld [vmem:[%s5 + $0x44] sm:$0xf]
    %v2288 = vld [vmem:[%s5 + $0x48] sm:$0xf]
    %v2289 = vld [vmem:[%s5 + $0x4c] sm:$0xf]
    %v2290 = vld [vmem:[%s5 + $0x50] sm:$0xf]
    %v2291 = vld [vmem:[%s5 + $0x54] sm:$0xf]
    %v2292 = vld [vmem:[%s5 + $0x58] sm:$0xf]
    %v2293 = vld [vmem:[%s5 + $0x5c] sm:$0xf]
    %v2294 = vld [vmem:[%s5 + $0x60] sm:$0xf]
    %v2295 = vld [vmem:[%s5 + $0x64] sm:$0xf]
    %v2296 = vld [vmem:[%s5 + $0x68] sm:$0xf]
    %v2297 = vld [vmem:[%s5 + $0x6c] sm:$0xf]
    %v2298 = vld [vmem:[%s5 + $0x70] sm:$0xf]
    %v2299 = vld [vmem:[%s5 + $0x74] sm:$0xf]
    %v2300 = vld [vmem:[%s5 + $0x78] sm:$0xf]
    %v2301 = vld [vmem:[%s5 + $0x7c] sm:$0xf]
    %v2302 = vld [vmem:[%s6] sm:$0x1]
    %v2304 = vlaneseq
    %v2305 = vshrl.u32 %v2304, 7
    %v2306 = vsub.s32 0, %v2305
    %v2307 = vrot.slane %v2302, %v2306
    %v2341 = vunpack.c.l.b16 %v2270
    %v2342 = vunpack.c.l.b16 %v2271
    %v2343 = vunpack.c.l.b16 %v2272
    %v2344 = vunpack.c.l.b16 %v2273
    %v2345 = vunpack.c.l.b16 %v2274
    %v2346 = vunpack.c.l.b16 %v2275
    %v2347 = vunpack.c.l.b16 %v2276
    %v2348 = vunpack.c.l.b16 %v2277
    %v2349 = vunpack.c.l.b16 %v2278
    %v2350 = vunpack.c.l.b16 %v2279
    %v2351 = vunpack.c.l.b16 %v2280
    %v2352 = vunpack.c.l.b16 %v2281
    %v2353 = vunpack.c.l.b16 %v2282
    %v2354 = vunpack.c.l.b16 %v2283
    %v2355 = vunpack.c.l.b16 %v2284
    %v2356 = vunpack.c.l.b16 %v2285
    %v2357 = vunpack.c.l.b16 %v2286
    %v2358 = vunpack.c.l.b16 %v2287
    %v2359 = vunpack.c.l.b16 %v2288
    %v2360 = vunpack.c.l.b16 %v2289
    %v2361 = vunpack.c.l.b16 %v2290
    %v2362 = vunpack.c.l.b16 %v2291
    %v2363 = vunpack.c.l.b16 %v2292
    %v2364 = vunpack.c.l.b16 %v2293
    %v2365 = vunpack.c.l.b16 %v2294
    %v2366 = vunpack.c.l.b16 %v2295
    %v2367 = vunpack.c.l.b16 %v2296
    %v2368 = vunpack.c.l.b16 %v2297
    %v2369 = vunpack.c.l.b16 %v2298
    %v2370 = vunpack.c.l.b16 %v2299
    %v2371 = vunpack.c.l.b16 %v2300
    %v2372 = vunpack.c.l.b16 %v2301
    %v2373 = vpack.c.b16 %v2342, %v2341
    %v2374 = vpack.c.b16 %v2344, %v2343
    %v2375 = vpack.c.b16 %v2346, %v2345
    %v2376 = vpack.c.b16 %v2348, %v2347
    %v2377 = vpack.c.b16 %v2350, %v2349
    %v2378 = vpack.c.b16 %v2352, %v2351
    %v2379 = vpack.c.b16 %v2354, %v2353
    %v2380 = vpack.c.b16 %v2356, %v2355
    %v2381 = vpack.c.b16 %v2358, %v2357
    %v2382 = vpack.c.b16 %v2360, %v2359
    %v2383 = vpack.c.b16 %v2362, %v2361
    %v2384 = vpack.c.b16 %v2364, %v2363
    %v2385 = vpack.c.b16 %v2366, %v2365
    %v2386 = vpack.c.b16 %v2368, %v2367
    %v2387 = vpack.c.b16 %v2370, %v2369
    %v2388 = vpack.c.b16 %v2372, %v2371
    %2405 = vmatprep.subr.bf16.mxu0 0
    %2406 = vmatpush1.bf16.msra.mxu0 %v2373
    %2407 = vmatprep.subr.bf16.mxu0 0
    %2408 = vmatpush1.bf16.msra.mxu0 %v2374
    %2409 = vmatprep.subr.bf16.mxu0 0
    %2410 = vmatpush1.bf16.msra.mxu0 %v2375
    %2411 = vmatprep.subr.bf16.mxu0 0
    %2412 = vmatpush1.bf16.msra.mxu0 %v2376
    %2413 = vmatprep.subr.bf16.mxu0 0
    %2414 = vmatpush1.bf16.msra.mxu0 %v2377
    %2415 = vmatprep.subr.bf16.mxu0 0
    %2416 = vmatpush1.bf16.msra.mxu0 %v2378
    %2417 = vmatprep.subr.bf16.mxu0 0
    %2418 = vmatpush1.bf16.msra.mxu0 %v2379
    %2419 = vmatprep.subr.bf16.mxu0 0
    %2420 = vmatpush1.bf16.msra.mxu0 %v2380
    %2421 = vmatprep.subr.bf16.mxu0 0
    %2422 = vmatpush1.bf16.msra.mxu0 %v2381
    %2423 = vmatprep.subr.bf16.mxu0 0
    %2424 = vmatpush1.bf16.msra.mxu0 %v2382
    %2425 = vmatprep.subr.bf16.mxu0 0
    %2426 = vmatpush1.bf16.msra.mxu0 %v2383
    %2427 = vmatprep.subr.bf16.mxu0 0
    %2428 = vmatpush1.bf16.msra.mxu0 %v2384
    %2429 = vmatprep.subr.bf16.mxu0 0
    %2430 = vmatpush1.bf16.msra.mxu0 %v2385
    %2431 = vmatprep.subr.bf16.mxu0 0
    %2432 = vmatpush1.bf16.msra.mxu0 %v2386
    %2433 = vmatprep.subr.bf16.mxu0 0
    %2434 = vmatpush1.bf16.msra.mxu0 %v2387
    %2435 = vmatprep.subr.bf16.mxu0 0
    %2436 = vmatpush1.bf16.msra.mxu0 %v2388
    %2437 = vmatprep.mubr.bf16.mxu0 %v2267
    %2438 = vmatmul.mubr.bf16.gmra.mrb[0].mxu0 %v2266
    %v2439 = vpop.f32.mrb[0].mxu0
    %v2440 = vadd.f32 %v2307, %v2439
    %v2441 = vpop.f32.mrb[0].mxu0
    %v2442 = vpop.f32.mrb[0].mxu0
    %v2443 = vadd.f32 %v2307, %v2442
    %v2444 = vpop.f32.mrb[0].mxu0
    %2445 = vmatprep.mubr.bf16.mxu0 %v2269
    %2446 = vmatmul.mubr.bf16.gmra.mrb[0].mxu0 %v2268
    %v2447 = vpop.f32.mrb[0].mxu0
    %v2448 = vadd.f32 %v2307, %v2447
    %v2449 = vpop.f32.mrb[0].mxu0
    %v2450 = vpop.f32.mrb[0].mxu0
    %v2451 = vadd.f32 %v2307, %v2450
    %v2452 = vpop.f32.mrb[0].mxu0
    %2453 = vdwg.mxu0
    %v2454 = vmax.f32 %v2440, 0.0
    %v2455 = vmax.f32 %v2443, 0.0
    %v2456 = vmax.f32 %v2448, 0.0
    %v2457 = vmax.f32 %v2451, 0.0
    %v2458 = vpack.c.bf16 %v2455, %v2454
    %v2459 = vpack.c.bf16 %v2457, %v2456
    %v2460 = vld [vmem:[%s7] sm:$0xf]
    %v2461 = vld [vmem:[%s7 + $0x4] sm:$0xf]
    %v2462 = vld [vmem:[%s7 + $0x8] sm:$0xf]
    %v2463 = vld [vmem:[%s7 + $0xc] sm:$0xf]
    %v2464 = vld [vmem:[%s7 + $0x10] sm:$0xf]
    %v2465 = vld [vmem:[%s7 + $0x14] sm:$0xf]
    %v2466 = vld [vmem:[%s7 + $0x18] sm:$0xf]
    %v2467 = vld [vmem:[%s7 + $0x1c] sm:$0xf]
    %v2468 = vld [vmem:[%s7 + $0x20] sm:$0xf]
    %v2469 = vld [vmem:[%s7 + $0x24] sm:$0xf]
    %v2470 = vld [vmem:[%s7 + $0x28] sm:$0xf]
    %v2471 = vld [vmem:[%s7 + $0x2c] sm:$0xf]
    %v2472 = vld [vmem:[%s7 + $0x30] sm:$0xf]
    %v2473 = vld [vmem:[%s7 + $0x34] sm:$0xf]
    %v2474 = vld [vmem:[%s7 + $0x38] sm:$0xf]
    %v2475 = vld [vmem:[%s7 + $0x3c] sm:$0xf]
    %v2476 = vld [vmem:[%s8] sm:$0x1]
    %v2478 = vlaneseq
    %v2479 = vshrl.u32 %v2478, 7
    %v2480 = vsub.s32 0, %v2479
    %v2481 = vrot.slane %v2476, %v2480
    %v2499 = vunpack.c.l.b16 %v2460
    %v2500 = vunpack.c.l.b16 %v2461
    %v2501 = vunpack.c.l.b16 %v2462
    %v2502 = vunpack.c.l.b16 %v2463
    %v2503 = vunpack.c.l.b16 %v2464
    %v2504 = vunpack.c.l.b16 %v2465
    %v2505 = vunpack.c.l.b16 %v2466
    %v2506 = vunpack.c.l.b16 %v2467
    %v2507 = vunpack.c.l.b16 %v2468
    %v2508 = vunpack.c.l.b16 %v2469
    %v2509 = vunpack.c.l.b16 %v2470
    %v2510 = vunpack.c.l.b16 %v2471
    %v2511 = vunpack.c.l.b16 %v2472
    %v2512 = vunpack.c.l.b16 %v2473
    %v2513 = vunpack.c.l.b16 %v2474
    %v2514 = vunpack.c.l.b16 %v2475
    %v2515 = vpack.c.b16 %v2500, %v2499
    %v2516 = vpack.c.b16 %v2502, %v2501
    %v2517 = vpack.c.b16 %v2504, %v2503
    %v2518 = vpack.c.b16 %v2506, %v2505
    %v2519 = vpack.c.b16 %v2508, %v2507
    %v2520 = vpack.c.b16 %v2510, %v2509
    %v2521 = vpack.c.b16 %v2512, %v2511
    %v2522 = vpack.c.b16 %v2514, %v2513
    %2531 = vmatprep.subr.bf16.mxu0 0
    %2532 = vmatpush1.bf16.msra.mxu0 %v2515
    %2533 = vmatprep.subr.bf16.mxu0 0
    %2534 = vmatpush1.bf16.msra.mxu0 %v2516
    %2535 = vmatprep.subr.bf16.mxu0 0
    %2536 = vmatpush1.bf16.msra.mxu0 %v2517
    %2537 = vmatprep.subr.bf16.mxu0 0
    %2538 = vmatpush1.bf16.msra.mxu0 %v2518
    %2539 = vmatprep.subr.bf16.mxu0 0
    %2540 = vmatpush1.bf16.msra.mxu0 %v2519
    %2541 = vmatprep.subr.bf16.mxu0 0
    %2542 = vmatpush1.bf16.msra.mxu0 %v2520
    %2543 = vmatprep.subr.bf16.mxu0 0
    %2544 = vmatpush1.bf16.msra.mxu0 %v2521
    %2545 = vmatprep.subr.bf16.mxu0 0
    %2546 = vmatpush1.bf16.msra.mxu0 %v2522
    %2547 = vmatprep.subr.bf16.mxu0 0
    %2548 = vmatpush1.bf16.msra.mxu0 0
    %2549 = vmatprep.subr.bf16.mxu0 0
    %2550 = vmatpush1.bf16.msra.mxu0 0
    %2551 = vmatprep.subr.bf16.mxu0 0
    %2552 = vmatpush1.bf16.msra.mxu0 0
    %2553 = vmatprep.subr.bf16.mxu0 0
    %2554 = vmatpush1.bf16.msra.mxu0 0
    %2555 = vmatprep.subr.bf16.mxu0 0
    %2556 = vmatpush1.bf16.msra.mxu0 0
    %2557 = vmatprep.subr.bf16.mxu0 0
    %2558 = vmatpush1.bf16.msra.mxu0 0
    %2559 = vmatprep.subr.bf16.mxu0 0
    %2560 = vmatpush1.bf16.msra.mxu0 0
    %2561 = vmatprep.subr.bf16.mxu0 0
    %2562 = vmatpush1.bf16.msra.mxu0 0
    %2563 = vmatprep.mubr.bf16.mxu0 0
    %2564 = vmatmul.mubr.bf16.gmra.mrb[0].mxu0 %v2458
    %v2565 = vpop.f32.mrb[0].mxu0
    %v2566 = vadd.f32 %v2481, %v2565
    %v2567 = vpop.f32.mrb[0].mxu0
    %v2568 = vpop.f32.mrb[0].mxu0
    %v2569 = vadd.f32 %v2481, %v2568
    %v2570 = vpop.f32.mrb[0].mxu0
    %2571 = vmatprep.mubr.bf16.mxu0 0
    %2572 = vmatmul.mubr.bf16.gmra.mrb[0].mxu0 %v2459
    %v2573 = vpop.f32.mrb[0].mxu0
    %v2574 = vadd.f32 %v2481, %v2573
    %v2575 = vpop.f32.mrb[0].mxu0
    %v2576 = vpop.f32.mrb[0].mxu0
    %v2577 = vadd.f32 %v2481, %v2576
    %v2578 = vpop.f32.mrb[0].mxu0
    %2579 = vdwg.mxu0
    %2580 = vst [vmem:[%s9] sm:$0xff] %v2566
    %2581 = vst [vmem:[%s9 + $0x8] sm:$0xff] %v2569
    %2582 = vst [vmem:[%s9 + $0x10] sm:$0xff] %v2574
    %2583 = vst [vmem:[%s9 + $0x18] sm:$0xff] %v2577
    // Predicated region
    $region46: #{net_forward.1} parent=1 // pred_check
      _
    $region47: #{net_forward.1} parent=1 // pred_check_branch
      %2585 = sbr.rel (0) target = $region49
    $region48: #{net_forward.1} parent=1 // pred_region
      _
    $region49: #{net_forward.1} parent=1 // pred_fallthru
      _
    // Predicated region
    $region50: #{net_forward.1} parent=1 // pred_check
      _
    $region51: #{net_forward.1} parent=1 // pred_check_branch
      %2587 = sbr.rel (0) target = $region53
    $region52: #{net_forward.1} parent=1 // pred_region
      _
    $region53: #{net_forward.1} parent=1 // pred_fallthru
      _
    %2588 = vsyncpa [#allocation3], 1
    %2589 = vsyncpa [#allocation5], 1

</llo_original>
